<compile_context>
chip_gen: v5e
topology: v5e:2x2
jax: 0.10.0
libtpu: 0.0.40
codegen_flags: <defaults>
</compile_context>

<pallas_src>
import jax
import jax.numpy as jnp
from jax.experimental import pallas as pl
from jax.experimental.pallas import tpu as pltpu

# ---- hyperparameters (mirror `args` of the original script, at small sizes) ----
VOCAB = 32            # len(itos) + 3
VPAD = 128            # vocab padded to one full 128-lane group (lane-dense writeback)
EMB = 32              # 2 * args.word_embedding_size
HID = 32              # args.hidden_dim_lm
LAYERS = 2            # args.layer_num
SEQ_LEN = 8           # args.sequence_length
BATCH = 8             # args.NUMBER_OF_REPLICATES * args.batchSize
NEG_BIG = -1e30       # "minus infinity" for padded vocab lanes


def _lm_kernel(inp_ref, tgt_ref, embw_ref, b0_ref, whh0_ref,
               w1_ref, b1_ref, wout_ref, bout_ref,
               logp_ref, nll_ref):
    """Fused embedding + 2-layer LSTM recurrence + output Linear + LogSoftmax + NLL."""
    T, B, H = SEQ_LEN, BATCH, HID

    # ---- prologue: fused embedding gather + layer-0 input projection, all t ----
    # one-hot(ids) @ (emb @ W_ih0)  ==  emb[ids] @ W_ih0 ; folded bias b0 added.
    lane_v = jax.lax.broadcasted_iota(jnp.int32, (T * B, VOCAB), 1)
    onehot_in = (lane_v == inp_ref[...]).astype(jnp.float32)            # (T*B, V)
    xg = jnp.dot(onehot_in, embw_ref[...],
                 preferred_element_type=jnp.float32) + b0_ref[...]      # (T*B, 4H)

    # ---- loop-invariant hoists (weights, broadcast bias, gate lane mask) ----
    whh0 = whh0_ref[...]                                                # (H, 4H)
    w1 = w1_ref[...]                                                    # (2H, 4H)
    b1 = jnp.broadcast_to(b1_ref[...], (B, 4 * H))
    lane = jax.lax.broadcasted_iota(jnp.int32, (B, 4 * H), 1)
    is_g = (lane >= 2 * H) & (lane < 3 * H)                             # tanh lanes

    def activate(gates, c_prev):
        # gates already column-pre-scaled (i/f/o x0.5, g x1.0), so one tanh gives
        # everything: sigma(z) = 0.5*(tanh(z/2)+1) on i/f/o lanes, tanh(z) on g.
        th = jnp.tanh(gates)
        act = jnp.where(is_g, th, 0.5 * (th + 1.0))
        i = act[:, 0 * H:1 * H]
        f = act[:, 1 * H:2 * H]
        g = act[:, 2 * H:3 * H]
        o = act[:, 3 * H:4 * H]
        c_new = f * c_prev + i * g
        h_new = o * jnp.tanh(c_new)
        return h_new, c_new

    # self.hidden is None -> zero initial (h, c) for every layer
    z = jnp.zeros((B, H), jnp.float32)
    h0, c0, h1, c1 = z, z, z, z
    h1_steps = []
    for t in range(T):                      # static unroll: all slices compile-time
        # layer 0: input part precomputed; only the recurrent dot is serial
        g0 = xg[t * B:(t + 1) * B, :] + jnp.dot(
            h0, whh0, preferred_element_type=jnp.float32)
        h0, c0 = activate(g0, c0)
        # layer 1: one fused matmul against [W_ih1; W_hh1] (lane concat is cheap XLU)
        h_cat = jnp.concatenate([h0, h1], axis=-1)                      # (B, 2H)
        g1 = jnp.dot(h_cat, w1, preferred_element_type=jnp.float32) + b1
        h1, c1 = activate(g1, c1)
        h1_steps.append(h1)

    h1_all = jnp.concatenate(h1_steps, axis=0)                          # (T*B, H)

    # ---- epilogue: output Linear + LogSoftmax over all T*B rows at once ----
    # Padded vocab lanes: zero weight columns + NEG_BIG bias -> exp() == 0, so they
    # do not perturb the log-sum-exp; single unmasked (T*B, 128) store.
    logits = (jnp.dot(h1_all, wout_ref[...], preferred_element_type=jnp.float32)
              + bout_ref[...])
    m = jnp.max(logits, axis=-1, keepdims=True)
    lse = m + jnp.log(jnp.sum(jnp.exp(logits - m), axis=-1, keepdims=True))
    logp = logits - lse
    logp_ref[...] = logp

    # NLLLoss(size_average=False, reduce=False, ignore_index=0):
    # lane-compare one-hot select + lane reduce, masked where target == 0.
    tgt = tgt_ref[...]                                                  # (T*B, 1)
    lane_vp = jax.lax.broadcasted_iota(jnp.int32, (T * B, VPAD), 1)
    picked = jnp.where(lane_vp == tgt, logp, 0.0)
    nll = -jnp.sum(picked, axis=-1, keepdims=True)                      # (T*B, 1)
    nll_ref[...] = jnp.where(tgt == 0, 0.0, nll)


def plain_lm_forward(numeric, params):
    """Mirrors PlainLanguageModel.forward(numeric) with computeSurprisals=True.

    numeric: int32 (SEQ_LEN + 1, BATCH)
    returns (lossTensor (T, B), num_targets, None, log_probs (T, B, VOCAB))
    """
    Tp1, B = numeric.shape
    T = Tp1 - 1
    assert B == BATCH and Tp1 == SEQ_LEN + 1

    inp_col = numeric[:-1].astype(jnp.int32).reshape(T * B, 1)   # time-major rows
    tgt_col = numeric[1:].astype(jnp.int32).reshape(T * B, 1)

    vmem = pl.BlockSpec(memory_space=pltpu.MemorySpace.VMEM)
    logp_padded, nll_col = pl.pallas_call(
        _lm_kernel,
        out_shape=(jax.ShapeDtypeStruct((T * B, VPAD), jnp.float32),
                   jax.ShapeDtypeStruct((T * B, 1), jnp.float32)),
        in_specs=[vmem] * 9,
        out_specs=(vmem, vmem),
    )(inp_col, tgt_col,
      params["emb_wih0"], params["b0"], params["whh0"],
      params["w1"], params["b1"],
      params["wout_pad"], params["bout_pad"])

    log_probs = logp_padded[:, :VOCAB].reshape(T, B, VOCAB)
    lossTensor = nll_col.reshape(T, B)

    # NOTE: like the original, num_targets = target_tensor.view(-1).size()[0]
    # counts ignored (target==0) positions too.
    return lossTensor, T * B, None, log_probs


def init_params(key):
    """Synthetic parameters matching the PyTorch module's shapes.

    Returns (kernel_params, raw_params): kernel_params have the column pre-scale,
    the emb@W_ih0 fusion and the [W_ih1;W_hh1] concat baked in; raw_params keep the
    torch layout for the pure-JAX reference check.
    """
    ks = jax.random.split(key, 11)
    bound = 1.0 / (HID ** 0.5)

    def u(k, shape):
        return jax.random.uniform(k, shape, jnp.float32, -bound, bound)

    raw = dict(
        emb=jax.random.normal(ks[0], (VOCAB, EMB), jnp.float32),  # nn.Embedding ~N(0,1)
        wih0=u(ks[1], (4 * HID, EMB)), whh0=u(ks[2], (4 * HID, HID)),
        bih0=u(ks[3], (4 * HID,)), bhh0=u(ks[4], (4 * HID,)),
        wih1=u(ks[5], (4 * HID, HID)), whh1=u(ks[6], (4 * HID, HID)),
        bih1=u(ks[7], (4 * HID,)), bhh1=u(ks[8], (4 * HID,)),
        wout=u(ks[9], (VOCAB, HID)), bout=u(ks[10], (VOCAB,)),
    )

    # i/f/o gate columns x0.5, g columns x1.0 -> single-tanh activation in kernel.
    col_scale = jnp.full((4 * HID,), 0.5, jnp.float32).at[2 * HID:3 * HID].set(1.0)

    wih0 = raw["wih0"].T * col_scale
    whh0 = raw["whh0"].T * col_scale
    b0 = ((raw["bih0"] + raw["bhh0"]) * col_scale).reshape(1, 4 * HID)
    emb_wih0 = raw["emb"] @ wih0                 # fuse embedding with layer-0 W_ih

    wih1 = raw["wih1"].T * col_scale
    whh1 = raw["whh1"].T * col_scale
    w1 = jnp.concatenate([wih1, whh1], axis=0)   # (2H, 4H): one dot per step
    b1 = ((raw["bih1"] + raw["bhh1"]) * col_scale).reshape(1, 4 * HID)

    # nn.Linear(hidden_dim_lm, len(itos)+3), padded to 128 lanes for a dense store
    wout_pad = jnp.zeros((HID, VPAD), jnp.float32).at[:, :VOCAB].set(raw["wout"].T)
    bout_pad = jnp.full((1, VPAD), NEG_BIG, jnp.float32).at[0, :VOCAB].set(raw["bout"])

    params = dict(emb_wih0=emb_wih0, b0=b0, whh0=whh0, w1=w1, b1=b1,
                  wout_pad=wout_pad, bout_pad=bout_pad)
    return params, raw


def reference_forward(numeric, raw):
    """Pure-JAX mirror of the PyTorch module's forward (for correctness checking)."""
    B = numeric.shape[1]
    inp = numeric[:-1]
    tgt = numeric[1:]
    x = jnp.take(raw["emb"], inp, axis=0)                       # (T, B, E)

    def lstm_layer(x_seq, wih, whh, bih, bhh):
        Hh = whh.shape[1]

        def step(carry, x_t):
            h, c = carry
            gates = x_t @ wih.T + h @ whh.T + bih + bhh
            i, f, g, o = jnp.split(gates, 4, axis=-1)
            i, f, o = jax.nn.sigmoid(i), jax.nn.sigmoid(f), jax.nn.sigmoid(o)
            g = jnp.tanh(g)
            c = f * c + i * g
            h = o * jnp.tanh(c)
            return (h, c), h

        h0 = jnp.zeros((B, Hh), jnp.float32)
        _, ys = jax.lax.scan(step, (h0, h0), x_seq)
        return ys

    h1 = lstm_layer(x, raw["wih0"], raw["whh0"], raw["bih0"], raw["bhh0"])
    h2 = lstm_layer(h1, raw["wih1"], raw["whh1"], raw["bih1"], raw["bhh1"])
    logits = h2 @ raw["wout"].T + raw["bout"]
    logp = jax.nn.log_softmax(logits, axis=-1)
    nll = -jnp.take_along_axis(logp, tgt[..., None].astype(jnp.int32), axis=-1)[..., 0]
    loss = jnp.where(tgt == 0, 0.0, nll)
    return loss, logp


if __name__ == "__main__":
    key = jax.random.PRNGKey(0)
    pkey, dkey = jax.random.split(key)
    params, raw = init_params(pkey)

    # numeric: (sequence_length + 1, NUMBER_OF_REPLICATES * batchSize) token ids,
    # including some 0s (the ignore_index / padding id).
    numeric = jax.random.randint(dkey, (SEQ_LEN + 1, BATCH), 0, VOCAB, dtype=jnp.int32)

    lossTensor, n_targets, _, log_probs = plain_lm_forward(numeric, params)
    jax.block_until_ready((lossTensor, log_probs))

    assert lossTensor.shape == (SEQ_LEN, BATCH)
    assert log_probs.shape == (SEQ_LEN, BATCH, VOCAB)
    assert n_targets == SEQ_LEN * BATCH
    assert bool(jnp.all(jnp.isfinite(lossTensor)))
    assert bool(jnp.all(jnp.isfinite(log_probs)))

    # Pure-JAX reference check (same math, torch-layout weights).
    ref_loss, ref_logp = reference_forward(numeric, raw)
    err_lp = float(jnp.max(jnp.abs(log_probs - ref_logp)))
    err_ls = float(jnp.max(jnp.abs(lossTensor - ref_loss)))
    assert err_lp < 2e-3, f"log_probs mismatch: {err_lp}"
    assert err_ls < 2e-3, f"lossTensor mismatch: {err_ls}"

    # TODO(synk): char_dropout / bernoulli weight-dropout samplers, the printHere
    # debug branch and the scalar train_loss are unused by this forward path; omitted.
    print("KERNEL_OK")
</pallas_src>

<mosaic_0001>
module attributes {stable_mosaic.version = 11 : i64} {
  func.func @_lm_kernel(%arg0: memref<64x1xi32, #tpu.memory_space<vmem>>, %arg1: memref<64x1xi32, #tpu.memory_space<vmem>>, %arg2: memref<32x128xf32, #tpu.memory_space<vmem>>, %arg3: memref<1x128xf32, #tpu.memory_space<vmem>>, %arg4: memref<32x128xf32, #tpu.memory_space<vmem>>, %arg5: memref<64x128xf32, #tpu.memory_space<vmem>>, %arg6: memref<1x128xf32, #tpu.memory_space<vmem>>, %arg7: memref<32x128xf32, #tpu.memory_space<vmem>>, %arg8: memref<1x128xf32, #tpu.memory_space<vmem>>, %arg9: memref<64x128xf32, #tpu.memory_space<vmem>>, %arg10: memref<64x1xf32, #tpu.memory_space<vmem>>) attributes {dimension_semantics = [], scalar_prefetch = 0 : i64, scratch_operands = 0 : i64, tpu.core_type = #tpu.core_type<tc>} {
    %0 = tpu.iota {dimensions = array<i32: 1>} : vector<64x32xi32>
    %c0 = arith.constant 0 : index
    %c0_0 = arith.constant 0 : index
    %1 = vector.load %arg0[%c0, %c0_0] : memref<64x1xi32, #tpu.memory_space<vmem>>, vector<64x1xi32>
    %2 = vector.broadcast %1 : vector<64x1xi32> to vector<64x32xi32>
    %3 = arith.cmpi eq, %0, %2 : vector<64x32xi32>
    %4 = arith.extui %3 : vector<64x32xi1> to vector<64x32xi32>
    %5 = arith.sitofp %4 : vector<64x32xi32> to vector<64x32xf32>
    %c0_1 = arith.constant 0 : index
    %c0_2 = arith.constant 0 : index
    %6 = vector.load %arg2[%c0_1, %c0_2] : memref<32x128xf32, #tpu.memory_space<vmem>>, vector<32x128xf32>
    %cst = arith.constant dense<0.000000e+00> : vector<64x128xf32>
    %7 = tpu.matmul %5, %6, %cst {dimension_numbers = #tpu.dot_dimension_numbers<[1], [0], [0], [1], [0, 0, 1, 1], [], []>} : vector<64x32xf32>, vector<32x128xf32>, vector<64x128xf32> -> vector<64x128xf32>
    %c0_3 = arith.constant 0 : index
    %c0_4 = arith.constant 0 : index
    %8 = vector.load %arg3[%c0_3, %c0_4] : memref<1x128xf32, #tpu.memory_space<vmem>>, vector<1x128xf32>
    %9 = vector.broadcast %8 : vector<1x128xf32> to vector<64x128xf32>
    %10 = arith.addf %7, %9 : vector<64x128xf32>
    %c0_5 = arith.constant 0 : index
    %c0_6 = arith.constant 0 : index
    %11 = vector.load %arg4[%c0_5, %c0_6] : memref<32x128xf32, #tpu.memory_space<vmem>>, vector<32x128xf32>
    %c0_7 = arith.constant 0 : index
    %c0_8 = arith.constant 0 : index
    %12 = vector.load %arg5[%c0_7, %c0_8] : memref<64x128xf32, #tpu.memory_space<vmem>>, vector<64x128xf32>
    %c0_9 = arith.constant 0 : index
    %c0_10 = arith.constant 0 : index
    %13 = vector.load %arg6[%c0_9, %c0_10] : memref<1x128xf32, #tpu.memory_space<vmem>>, vector<1x128xf32>
    %14 = vector.shape_cast %13 : vector<1x128xf32> to vector<1x128xf32>
    %15 = vector.broadcast %14 : vector<1x128xf32> to vector<8x128xf32>
    %16 = tpu.iota {dimensions = array<i32: 1>} : vector<8x128xi32>
    %c64_i32 = arith.constant 64 : i32
    %17 = vector.broadcast %c64_i32 : i32 to vector<8x128xi32>
    %18 = arith.cmpi sge, %16, %17 : vector<8x128xi32>
    %c96_i32 = arith.constant 96 : i32
    %19 = vector.broadcast %c96_i32 : i32 to vector<8x128xi32>
    %20 = arith.cmpi slt, %16, %19 : vector<8x128xi32>
    %21 = arith.andi %18, %20 : vector<8x128xi1>
    %cst_11 = arith.constant 0.000000e+00 : f32
    %22 = vector.broadcast %cst_11 : f32 to vector<8x32xf32>
    %23 = vector.extract_strided_slice %10 {offsets = [0, 0], sizes = [8, 128], strides = [1, 1]} : vector<64x128xf32> to vector<8x128xf32>
    %cst_12 = arith.constant dense<0.000000e+00> : vector<8x128xf32>
    %24 = tpu.matmul %22, %11, %cst_12 {dimension_numbers = #tpu.dot_dimension_numbers<[1], [0], [0], [1], [0, 0, 1, 1], [], []>} : vector<8x32xf32>, vector<32x128xf32>, vector<8x128xf32> -> vector<8x128xf32>
    %25 = arith.addf %23, %24 : vector<8x128xf32>
    %26 = math.tanh %25 : vector<8x128xf32>
    %cst_13 = arith.constant 1.000000e+00 : f32
    %27 = vector.broadcast %cst_13 : f32 to vector<8x128xf32>
    %28 = arith.addf %26, %27 : vector<8x128xf32>
    %cst_14 = arith.constant 5.000000e-01 : f32
    %29 = vector.broadcast %cst_14 : f32 to vector<8x128xf32>
    %30 = arith.mulf %29, %28 : vector<8x128xf32>
    %31 = arith.select %21, %26, %30 : vector<8x128xi1>, vector<8x128xf32>
    %32 = vector.extract_strided_slice %31 {offsets = [0, 0], sizes = [8, 32], strides = [1, 1]} : vector<8x128xf32> to vector<8x32xf32>
    %33 = vector.extract_strided_slice %31 {offsets = [0, 32], sizes = [8, 32], strides = [1, 1]} : vector<8x128xf32> to vector<8x32xf32>
    %34 = vector.extract_strided_slice %31 {offsets = [0, 64], sizes = [8, 32], strides = [1, 1]} : vector<8x128xf32> to vector<8x32xf32>
    %35 = vector.extract_strided_slice %31 {offsets = [0, 96], sizes = [8, 32], strides = [1, 1]} : vector<8x128xf32> to vector<8x32xf32>
    %36 = arith.mulf %33, %22 : vector<8x32xf32>
    %37 = arith.mulf %32, %34 : vector<8x32xf32>
    %38 = arith.addf %36, %37 : vector<8x32xf32>
    %39 = math.tanh %38 : vector<8x32xf32>
    %40 = arith.mulf %35, %39 : vector<8x32xf32>
    %41 = tpu.concatenate %40, %22 in 1 : vector<8x32xf32>, vector<8x32xf32> -> vector<8x64xf32>
    %cst_15 = arith.constant dense<0.000000e+00> : vector<8x128xf32>
    %42 = tpu.matmul %41, %12, %cst_15 {dimension_numbers = #tpu.dot_dimension_numbers<[1], [0], [0], [1], [0, 0, 1, 1], [], []>} : vector<8x64xf32>, vector<64x128xf32>, vector<8x128xf32> -> vector<8x128xf32>
    %43 = arith.addf %42, %15 : vector<8x128xf32>
    %44 = math.tanh %43 : vector<8x128xf32>
    %cst_16 = arith.constant 1.000000e+00 : f32
    %45 = vector.broadcast %cst_16 : f32 to vector<8x128xf32>
    %46 = arith.addf %44, %45 : vector<8x128xf32>
    %cst_17 = arith.constant 5.000000e-01 : f32
    %47 = vector.broadcast %cst_17 : f32 to vector<8x128xf32>
    %48 = arith.mulf %47, %46 : vector<8x128xf32>
    %49 = arith.select %21, %44, %48 : vector<8x128xi1>, vector<8x128xf32>
    %50 = vector.extract_strided_slice %49 {offsets = [0, 0], sizes = [8, 32], strides = [1, 1]} : vector<8x128xf32> to vector<8x32xf32>
    %51 = vector.extract_strided_slice %49 {offsets = [0, 32], sizes = [8, 32], strides = [1, 1]} : vector<8x128xf32> to vector<8x32xf32>
    %52 = vector.extract_strided_slice %49 {offsets = [0, 64], sizes = [8, 32], strides = [1, 1]} : vector<8x128xf32> to vector<8x32xf32>
    %53 = vector.extract_strided_slice %49 {offsets = [0, 96], sizes = [8, 32], strides = [1, 1]} : vector<8x128xf32> to vector<8x32xf32>
    %54 = arith.mulf %51, %22 : vector<8x32xf32>
    %55 = arith.mulf %50, %52 : vector<8x32xf32>
    %56 = arith.addf %54, %55 : vector<8x32xf32>
    %57 = math.tanh %56 : vector<8x32xf32>
    %58 = arith.mulf %53, %57 : vector<8x32xf32>
    %59 = vector.extract_strided_slice %10 {offsets = [8, 0], sizes = [8, 128], strides = [1, 1]} : vector<64x128xf32> to vector<8x128xf32>
    %cst_18 = arith.constant dense<0.000000e+00> : vector<8x128xf32>
    %60 = tpu.matmul %40, %11, %cst_18 {dimension_numbers = #tpu.dot_dimension_numbers<[1], [0], [0], [1], [0, 0, 1, 1], [], []>} : vector<8x32xf32>, vector<32x128xf32>, vector<8x128xf32> -> vector<8x128xf32>
    %61 = arith.addf %59, %60 : vector<8x128xf32>
    %62 = math.tanh %61 : vector<8x128xf32>
    %cst_19 = arith.constant 1.000000e+00 : f32
    %63 = vector.broadcast %cst_19 : f32 to vector<8x128xf32>
    %64 = arith.addf %62, %63 : vector<8x128xf32>
    %cst_20 = arith.constant 5.000000e-01 : f32
    %65 = vector.broadcast %cst_20 : f32 to vector<8x128xf32>
    %66 = arith.mulf %65, %64 : vector<8x128xf32>
    %67 = arith.select %21, %62, %66 : vector<8x128xi1>, vector<8x128xf32>
    %68 = vector.extract_strided_slice %67 {offsets = [0, 0], sizes = [8, 32], strides = [1, 1]} : vector<8x128xf32> to vector<8x32xf32>
    %69 = vector.extract_strided_slice %67 {offsets = [0, 32], sizes = [8, 32], strides = [1, 1]} : vector<8x128xf32> to vector<8x32xf32>
    %70 = vector.extract_strided_slice %67 {offsets = [0, 64], sizes = [8, 32], strides = [1, 1]} : vector<8x128xf32> to vector<8x32xf32>
    %71 = vector.extract_strided_slice %67 {offsets = [0, 96], sizes = [8, 32], strides = [1, 1]} : vector<8x128xf32> to vector<8x32xf32>
    %72 = arith.mulf %69, %38 : vector<8x32xf32>
    %73 = arith.mulf %68, %70 : vector<8x32xf32>
    %74 = arith.addf %72, %73 : vector<8x32xf32>
    %75 = math.tanh %74 : vector<8x32xf32>
    %76 = arith.mulf %71, %75 : vector<8x32xf32>
    %77 = tpu.concatenate %76, %58 in 1 : vector<8x32xf32>, vector<8x32xf32> -> vector<8x64xf32>
    %cst_21 = arith.constant dense<0.000000e+00> : vector<8x128xf32>
    %78 = tpu.matmul %77, %12, %cst_21 {dimension_numbers = #tpu.dot_dimension_numbers<[1], [0], [0], [1], [0, 0, 1, 1], [], []>} : vector<8x64xf32>, vector<64x128xf32>, vector<8x128xf32> -> vector<8x128xf32>
    %79 = arith.addf %78, %15 : vector<8x128xf32>
    %80 = math.tanh %79 : vector<8x128xf32>
    %cst_22 = arith.constant 1.000000e+00 : f32
    %81 = vector.broadcast %cst_22 : f32 to vector<8x128xf32>
    %82 = arith.addf %80, %81 : vector<8x128xf32>
    %cst_23 = arith.constant 5.000000e-01 : f32
    %83 = vector.broadcast %cst_23 : f32 to vector<8x128xf32>
    %84 = arith.mulf %83, %82 : vector<8x128xf32>
    %85 = arith.select %21, %80, %84 : vector<8x128xi1>, vector<8x128xf32>
    %86 = vector.extract_strided_slice %85 {offsets = [0, 0], sizes = [8, 32], strides = [1, 1]} : vector<8x128xf32> to vector<8x32xf32>
    %87 = vector.extract_strided_slice %85 {offsets = [0, 32], sizes = [8, 32], strides = [1, 1]} : vector<8x128xf32> to vector<8x32xf32>
    %88 = vector.extract_strided_slice %85 {offsets = [0, 64], sizes = [8, 32], strides = [1, 1]} : vector<8x128xf32> to vector<8x32xf32>
    %89 = vector.extract_strided_slice %85 {offsets = [0, 96], sizes = [8, 32], strides = [1, 1]} : vector<8x128xf32> to vector<8x32xf32>
    %90 = arith.mulf %87, %56 : vector<8x32xf32>
    %91 = arith.mulf %86, %88 : vector<8x32xf32>
    %92 = arith.addf %90, %91 : vector<8x32xf32>
    %93 = math.tanh %92 : vector<8x32xf32>
    %94 = arith.mulf %89, %93 : vector<8x32xf32>
    %95 = vector.extract_strided_slice %10 {offsets = [16, 0], sizes = [8, 128], strides = [1, 1]} : vector<64x128xf32> to vector<8x128xf32>
    %cst_24 = arith.constant dense<0.000000e+00> : vector<8x128xf32>
    %96 = tpu.matmul %76, %11, %cst_24 {dimension_numbers = #tpu.dot_dimension_numbers<[1], [0], [0], [1], [0, 0, 1, 1], [], []>} : vector<8x32xf32>, vector<32x128xf32>, vector<8x128xf32> -> vector<8x128xf32>
    %97 = arith.addf %95, %96 : vector<8x128xf32>
    %98 = math.tanh %97 : vector<8x128xf32>
    %cst_25 = arith.constant 1.000000e+00 : f32
    %99 = vector.broadcast %cst_25 : f32 to vector<8x128xf32>
    %100 = arith.addf %98, %99 : vector<8x128xf32>
    %cst_26 = arith.constant 5.000000e-01 : f32
    %101 = vector.broadcast %cst_26 : f32 to vector<8x128xf32>
    %102 = arith.mulf %101, %100 : vector<8x128xf32>
    %103 = arith.select %21, %98, %102 : vector<8x128xi1>, vector<8x128xf32>
    %104 = vector.extract_strided_slice %103 {offsets = [0, 0], sizes = [8, 32], strides = [1, 1]} : vector<8x128xf32> to vector<8x32xf32>
    %105 = vector.extract_strided_slice %103 {offsets = [0, 32], sizes = [8, 32], strides = [1, 1]} : vector<8x128xf32> to vector<8x32xf32>
    %106 = vector.extract_strided_slice %103 {offsets = [0, 64], sizes = [8, 32], strides = [1, 1]} : vector<8x128xf32> to vector<8x32xf32>
    %107 = vector.extract_strided_slice %103 {offsets = [0, 96], sizes = [8, 32], strides = [1, 1]} : vector<8x128xf32> to vector<8x32xf32>
    %108 = arith.mulf %105, %74 : vector<8x32xf32>
    %109 = arith.mulf %104, %106 : vector<8x32xf32>
    %110 = arith.addf %108, %109 : vector<8x32xf32>
    %111 = math.tanh %110 : vector<8x32xf32>
    %112 = arith.mulf %107, %111 : vector<8x32xf32>
    %113 = tpu.concatenate %112, %94 in 1 : vector<8x32xf32>, vector<8x32xf32> -> vector<8x64xf32>
    %cst_27 = arith.constant dense<0.000000e+00> : vector<8x128xf32>
    %114 = tpu.matmul %113, %12, %cst_27 {dimension_numbers = #tpu.dot_dimension_numbers<[1], [0], [0], [1], [0, 0, 1, 1], [], []>} : vector<8x64xf32>, vector<64x128xf32>, vector<8x128xf32> -> vector<8x128xf32>
    %115 = arith.addf %114, %15 : vector<8x128xf32>
    %116 = math.tanh %115 : vector<8x128xf32>
    %cst_28 = arith.constant 1.000000e+00 : f32
    %117 = vector.broadcast %cst_28 : f32 to vector<8x128xf32>
    %118 = arith.addf %116, %117 : vector<8x128xf32>
    %cst_29 = arith.constant 5.000000e-01 : f32
    %119 = vector.broadcast %cst_29 : f32 to vector<8x128xf32>
    %120 = arith.mulf %119, %118 : vector<8x128xf32>
    %121 = arith.select %21, %116, %120 : vector<8x128xi1>, vector<8x128xf32>
    %122 = vector.extract_strided_slice %121 {offsets = [0, 0], sizes = [8, 32], strides = [1, 1]} : vector<8x128xf32> to vector<8x32xf32>
    %123 = vector.extract_strided_slice %121 {offsets = [0, 32], sizes = [8, 32], strides = [1, 1]} : vector<8x128xf32> to vector<8x32xf32>
    %124 = vector.extract_strided_slice %121 {offsets = [0, 64], sizes = [8, 32], strides = [1, 1]} : vector<8x128xf32> to vector<8x32xf32>
    %125 = vector.extract_strided_slice %121 {offsets = [0, 96], sizes = [8, 32], strides = [1, 1]} : vector<8x128xf32> to vector<8x32xf32>
    %126 = arith.mulf %123, %92 : vector<8x32xf32>
    %127 = arith.mulf %122, %124 : vector<8x32xf32>
    %128 = arith.addf %126, %127 : vector<8x32xf32>
    %129 = math.tanh %128 : vector<8x32xf32>
    %130 = arith.mulf %125, %129 : vector<8x32xf32>
    %131 = vector.extract_strided_slice %10 {offsets = [24, 0], sizes = [8, 128], strides = [1, 1]} : vector<64x128xf32> to vector<8x128xf32>
    %cst_30 = arith.constant dense<0.000000e+00> : vector<8x128xf32>
    %132 = tpu.matmul %112, %11, %cst_30 {dimension_numbers = #tpu.dot_dimension_numbers<[1], [0], [0], [1], [0, 0, 1, 1], [], []>} : vector<8x32xf32>, vector<32x128xf32>, vector<8x128xf32> -> vector<8x128xf32>
    %133 = arith.addf %131, %132 : vector<8x128xf32>
    %134 = math.tanh %133 : vector<8x128xf32>
    %cst_31 = arith.constant 1.000000e+00 : f32
    %135 = vector.broadcast %cst_31 : f32 to vector<8x128xf32>
    %136 = arith.addf %134, %135 : vector<8x128xf32>
    %cst_32 = arith.constant 5.000000e-01 : f32
    %137 = vector.broadcast %cst_32 : f32 to vector<8x128xf32>
    %138 = arith.mulf %137, %136 : vector<8x128xf32>
    %139 = arith.select %21, %134, %138 : vector<8x128xi1>, vector<8x128xf32>
    %140 = vector.extract_strided_slice %139 {offsets = [0, 0], sizes = [8, 32], strides = [1, 1]} : vector<8x128xf32> to vector<8x32xf32>
    %141 = vector.extract_strided_slice %139 {offsets = [0, 32], sizes = [8, 32], strides = [1, 1]} : vector<8x128xf32> to vector<8x32xf32>
    %142 = vector.extract_strided_slice %139 {offsets = [0, 64], sizes = [8, 32], strides = [1, 1]} : vector<8x128xf32> to vector<8x32xf32>
    %143 = vector.extract_strided_slice %139 {offsets = [0, 96], sizes = [8, 32], strides = [1, 1]} : vector<8x128xf32> to vector<8x32xf32>
    %144 = arith.mulf %141, %110 : vector<8x32xf32>
    %145 = arith.mulf %140, %142 : vector<8x32xf32>
    %146 = arith.addf %144, %145 : vector<8x32xf32>
    %147 = math.tanh %146 : vector<8x32xf32>
    %148 = arith.mulf %143, %147 : vector<8x32xf32>
    %149 = tpu.concatenate %148, %130 in 1 : vector<8x32xf32>, vector<8x32xf32> -> vector<8x64xf32>
    %cst_33 = arith.constant dense<0.000000e+00> : vector<8x128xf32>
    %150 = tpu.matmul %149, %12, %cst_33 {dimension_numbers = #tpu.dot_dimension_numbers<[1], [0], [0], [1], [0, 0, 1, 1], [], []>} : vector<8x64xf32>, vector<64x128xf32>, vector<8x128xf32> -> vector<8x128xf32>
    %151 = arith.addf %150, %15 : vector<8x128xf32>
    %152 = math.tanh %151 : vector<8x128xf32>
    %cst_34 = arith.constant 1.000000e+00 : f32
    %153 = vector.broadcast %cst_34 : f32 to vector<8x128xf32>
    %154 = arith.addf %152, %153 : vector<8x128xf32>
    %cst_35 = arith.constant 5.000000e-01 : f32
    %155 = vector.broadcast %cst_35 : f32 to vector<8x128xf32>
    %156 = arith.mulf %155, %154 : vector<8x128xf32>
    %157 = arith.select %21, %152, %156 : vector<8x128xi1>, vector<8x128xf32>
    %158 = vector.extract_strided_slice %157 {offsets = [0, 0], sizes = [8, 32], strides = [1, 1]} : vector<8x128xf32> to vector<8x32xf32>
    %159 = vector.extract_strided_slice %157 {offsets = [0, 32], sizes = [8, 32], strides = [1, 1]} : vector<8x128xf32> to vector<8x32xf32>
    %160 = vector.extract_strided_slice %157 {offsets = [0, 64], sizes = [8, 32], strides = [1, 1]} : vector<8x128xf32> to vector<8x32xf32>
    %161 = vector.extract_strided_slice %157 {offsets = [0, 96], sizes = [8, 32], strides = [1, 1]} : vector<8x128xf32> to vector<8x32xf32>
    %162 = arith.mulf %159, %128 : vector<8x32xf32>
    %163 = arith.mulf %158, %160 : vector<8x32xf32>
    %164 = arith.addf %162, %163 : vector<8x32xf32>
    %165 = math.tanh %164 : vector<8x32xf32>
    %166 = arith.mulf %161, %165 : vector<8x32xf32>
    %167 = vector.extract_strided_slice %10 {offsets = [32, 0], sizes = [8, 128], strides = [1, 1]} : vector<64x128xf32> to vector<8x128xf32>
    %cst_36 = arith.constant dense<0.000000e+00> : vector<8x128xf32>
    %168 = tpu.matmul %148, %11, %cst_36 {dimension_numbers = #tpu.dot_dimension_numbers<[1], [0], [0], [1], [0, 0, 1, 1], [], []>} : vector<8x32xf32>, vector<32x128xf32>, vector<8x128xf32> -> vector<8x128xf32>
    %169 = arith.addf %167, %168 : vector<8x128xf32>
    %170 = math.tanh %169 : vector<8x128xf32>
    %cst_37 = arith.constant 1.000000e+00 : f32
    %171 = vector.broadcast %cst_37 : f32 to vector<8x128xf32>
    %172 = arith.addf %170, %171 : vector<8x128xf32>
    %cst_38 = arith.constant 5.000000e-01 : f32
    %173 = vector.broadcast %cst_38 : f32 to vector<8x128xf32>
    %174 = arith.mulf %173, %172 : vector<8x128xf32>
    %175 = arith.select %21, %170, %174 : vector<8x128xi1>, vector<8x128xf32>
    %176 = vector.extract_strided_slice %175 {offsets = [0, 0], sizes = [8, 32], strides = [1, 1]} : vector<8x128xf32> to vector<8x32xf32>
    %177 = vector.extract_strided_slice %175 {offsets = [0, 32], sizes = [8, 32], strides = [1, 1]} : vector<8x128xf32> to vector<8x32xf32>
    %178 = vector.extract_strided_slice %175 {offsets = [0, 64], sizes = [8, 32], strides = [1, 1]} : vector<8x128xf32> to vector<8x32xf32>
    %179 = vector.extract_strided_slice %175 {offsets = [0, 96], sizes = [8, 32], strides = [1, 1]} : vector<8x128xf32> to vector<8x32xf32>
    %180 = arith.mulf %177, %146 : vector<8x32xf32>
    %181 = arith.mulf %176, %178 : vector<8x32xf32>
    %182 = arith.addf %180, %181 : vector<8x32xf32>
    %183 = math.tanh %182 : vector<8x32xf32>
    %184 = arith.mulf %179, %183 : vector<8x32xf32>
    %185 = tpu.concatenate %184, %166 in 1 : vector<8x32xf32>, vector<8x32xf32> -> vector<8x64xf32>
    %cst_39 = arith.constant dense<0.000000e+00> : vector<8x128xf32>
    %186 = tpu.matmul %185, %12, %cst_39 {dimension_numbers = #tpu.dot_dimension_numbers<[1], [0], [0], [1], [0, 0, 1, 1], [], []>} : vector<8x64xf32>, vector<64x128xf32>, vector<8x128xf32> -> vector<8x128xf32>
    %187 = arith.addf %186, %15 : vector<8x128xf32>
    %188 = math.tanh %187 : vector<8x128xf32>
    %cst_40 = arith.constant 1.000000e+00 : f32
    %189 = vector.broadcast %cst_40 : f32 to vector<8x128xf32>
    %190 = arith.addf %188, %189 : vector<8x128xf32>
    %cst_41 = arith.constant 5.000000e-01 : f32
    %191 = vector.broadcast %cst_41 : f32 to vector<8x128xf32>
    %192 = arith.mulf %191, %190 : vector<8x128xf32>
    %193 = arith.select %21, %188, %192 : vector<8x128xi1>, vector<8x128xf32>
    %194 = vector.extract_strided_slice %193 {offsets = [0, 0], sizes = [8, 32], strides = [1, 1]} : vector<8x128xf32> to vector<8x32xf32>
    %195 = vector.extract_strided_slice %193 {offsets = [0, 32], sizes = [8, 32], strides = [1, 1]} : vector<8x128xf32> to vector<8x32xf32>
    %196 = vector.extract_strided_slice %193 {offsets = [0, 64], sizes = [8, 32], strides = [1, 1]} : vector<8x128xf32> to vector<8x32xf32>
    %197 = vector.extract_strided_slice %193 {offsets = [0, 96], sizes = [8, 32], strides = [1, 1]} : vector<8x128xf32> to vector<8x32xf32>
    %198 = arith.mulf %195, %164 : vector<8x32xf32>
    %199 = arith.mulf %194, %196 : vector<8x32xf32>
    %200 = arith.addf %198, %199 : vector<8x32xf32>
    %201 = math.tanh %200 : vector<8x32xf32>
    %202 = arith.mulf %197, %201 : vector<8x32xf32>
    %203 = vector.extract_strided_slice %10 {offsets = [40, 0], sizes = [8, 128], strides = [1, 1]} : vector<64x128xf32> to vector<8x128xf32>
    %cst_42 = arith.constant dense<0.000000e+00> : vector<8x128xf32>
    %204 = tpu.matmul %184, %11, %cst_42 {dimension_numbers = #tpu.dot_dimension_numbers<[1], [0], [0], [1], [0, 0, 1, 1], [], []>} : vector<8x32xf32>, vector<32x128xf32>, vector<8x128xf32> -> vector<8x128xf32>
    %205 = arith.addf %203, %204 : vector<8x128xf32>
    %206 = math.tanh %205 : vector<8x128xf32>
    %cst_43 = arith.constant 1.000000e+00 : f32
    %207 = vector.broadcast %cst_43 : f32 to vector<8x128xf32>
    %208 = arith.addf %206, %207 : vector<8x128xf32>
    %cst_44 = arith.constant 5.000000e-01 : f32
    %209 = vector.broadcast %cst_44 : f32 to vector<8x128xf32>
    %210 = arith.mulf %209, %208 : vector<8x128xf32>
    %211 = arith.select %21, %206, %210 : vector<8x128xi1>, vector<8x128xf32>
    %212 = vector.extract_strided_slice %211 {offsets = [0, 0], sizes = [8, 32], strides = [1, 1]} : vector<8x128xf32> to vector<8x32xf32>
    %213 = vector.extract_strided_slice %211 {offsets = [0, 32], sizes = [8, 32], strides = [1, 1]} : vector<8x128xf32> to vector<8x32xf32>
    %214 = vector.extract_strided_slice %211 {offsets = [0, 64], sizes = [8, 32], strides = [1, 1]} : vector<8x128xf32> to vector<8x32xf32>
    %215 = vector.extract_strided_slice %211 {offsets = [0, 96], sizes = [8, 32], strides = [1, 1]} : vector<8x128xf32> to vector<8x32xf32>
    %216 = arith.mulf %213, %182 : vector<8x32xf32>
    %217 = arith.mulf %212, %214 : vector<8x32xf32>
    %218 = arith.addf %216, %217 : vector<8x32xf32>
    %219 = math.tanh %218 : vector<8x32xf32>
    %220 = arith.mulf %215, %219 : vector<8x32xf32>
    %221 = tpu.concatenate %220, %202 in 1 : vector<8x32xf32>, vector<8x32xf32> -> vector<8x64xf32>
    %cst_45 = arith.constant dense<0.000000e+00> : vector<8x128xf32>
    %222 = tpu.matmul %221, %12, %cst_45 {dimension_numbers = #tpu.dot_dimension_numbers<[1], [0], [0], [1], [0, 0, 1, 1], [], []>} : vector<8x64xf32>, vector<64x128xf32>, vector<8x128xf32> -> vector<8x128xf32>
    %223 = arith.addf %222, %15 : vector<8x128xf32>
    %224 = math.tanh %223 : vector<8x128xf32>
    %cst_46 = arith.constant 1.000000e+00 : f32
    %225 = vector.broadcast %cst_46 : f32 to vector<8x128xf32>
    %226 = arith.addf %224, %225 : vector<8x128xf32>
    %cst_47 = arith.constant 5.000000e-01 : f32
    %227 = vector.broadcast %cst_47 : f32 to vector<8x128xf32>
    %228 = arith.mulf %227, %226 : vector<8x128xf32>
    %229 = arith.select %21, %224, %228 : vector<8x128xi1>, vector<8x128xf32>
    %230 = vector.extract_strided_slice %229 {offsets = [0, 0], sizes = [8, 32], strides = [1, 1]} : vector<8x128xf32> to vector<8x32xf32>
    %231 = vector.extract_strided_slice %229 {offsets = [0, 32], sizes = [8, 32], strides = [1, 1]} : vector<8x128xf32> to vector<8x32xf32>
    %232 = vector.extract_strided_slice %229 {offsets = [0, 64], sizes = [8, 32], strides = [1, 1]} : vector<8x128xf32> to vector<8x32xf32>
    %233 = vector.extract_strided_slice %229 {offsets = [0, 96], sizes = [8, 32], strides = [1, 1]} : vector<8x128xf32> to vector<8x32xf32>
    %234 = arith.mulf %231, %200 : vector<8x32xf32>
    %235 = arith.mulf %230, %232 : vector<8x32xf32>
    %236 = arith.addf %234, %235 : vector<8x32xf32>
    %237 = math.tanh %236 : vector<8x32xf32>
    %238 = arith.mulf %233, %237 : vector<8x32xf32>
    %239 = vector.extract_strided_slice %10 {offsets = [48, 0], sizes = [8, 128], strides = [1, 1]} : vector<64x128xf32> to vector<8x128xf32>
    %cst_48 = arith.constant dense<0.000000e+00> : vector<8x128xf32>
    %240 = tpu.matmul %220, %11, %cst_48 {dimension_numbers = #tpu.dot_dimension_numbers<[1], [0], [0], [1], [0, 0, 1, 1], [], []>} : vector<8x32xf32>, vector<32x128xf32>, vector<8x128xf32> -> vector<8x128xf32>
    %241 = arith.addf %239, %240 : vector<8x128xf32>
    %242 = math.tanh %241 : vector<8x128xf32>
    %cst_49 = arith.constant 1.000000e+00 : f32
    %243 = vector.broadcast %cst_49 : f32 to vector<8x128xf32>
    %244 = arith.addf %242, %243 : vector<8x128xf32>
    %cst_50 = arith.constant 5.000000e-01 : f32
    %245 = vector.broadcast %cst_50 : f32 to vector<8x128xf32>
    %246 = arith.mulf %245, %244 : vector<8x128xf32>
    %247 = arith.select %21, %242, %246 : vector<8x128xi1>, vector<8x128xf32>
    %248 = vector.extract_strided_slice %247 {offsets = [0, 0], sizes = [8, 32], strides = [1, 1]} : vector<8x128xf32> to vector<8x32xf32>
    %249 = vector.extract_strided_slice %247 {offsets = [0, 32], sizes = [8, 32], strides = [1, 1]} : vector<8x128xf32> to vector<8x32xf32>
    %250 = vector.extract_strided_slice %247 {offsets = [0, 64], sizes = [8, 32], strides = [1, 1]} : vector<8x128xf32> to vector<8x32xf32>
    %251 = vector.extract_strided_slice %247 {offsets = [0, 96], sizes = [8, 32], strides = [1, 1]} : vector<8x128xf32> to vector<8x32xf32>
    %252 = arith.mulf %249, %218 : vector<8x32xf32>
    %253 = arith.mulf %248, %250 : vector<8x32xf32>
    %254 = arith.addf %252, %253 : vector<8x32xf32>
    %255 = math.tanh %254 : vector<8x32xf32>
    %256 = arith.mulf %251, %255 : vector<8x32xf32>
    %257 = tpu.concatenate %256, %238 in 1 : vector<8x32xf32>, vector<8x32xf32> -> vector<8x64xf32>
    %cst_51 = arith.constant dense<0.000000e+00> : vector<8x128xf32>
    %258 = tpu.matmul %257, %12, %cst_51 {dimension_numbers = #tpu.dot_dimension_numbers<[1], [0], [0], [1], [0, 0, 1, 1], [], []>} : vector<8x64xf32>, vector<64x128xf32>, vector<8x128xf32> -> vector<8x128xf32>
    %259 = arith.addf %258, %15 : vector<8x128xf32>
    %260 = math.tanh %259 : vector<8x128xf32>
    %cst_52 = arith.constant 1.000000e+00 : f32
    %261 = vector.broadcast %cst_52 : f32 to vector<8x128xf32>
    %262 = arith.addf %260, %261 : vector<8x128xf32>
    %cst_53 = arith.constant 5.000000e-01 : f32
    %263 = vector.broadcast %cst_53 : f32 to vector<8x128xf32>
    %264 = arith.mulf %263, %262 : vector<8x128xf32>
    %265 = arith.select %21, %260, %264 : vector<8x128xi1>, vector<8x128xf32>
    %266 = vector.extract_strided_slice %265 {offsets = [0, 0], sizes = [8, 32], strides = [1, 1]} : vector<8x128xf32> to vector<8x32xf32>
    %267 = vector.extract_strided_slice %265 {offsets = [0, 32], sizes = [8, 32], strides = [1, 1]} : vector<8x128xf32> to vector<8x32xf32>
    %268 = vector.extract_strided_slice %265 {offsets = [0, 64], sizes = [8, 32], strides = [1, 1]} : vector<8x128xf32> to vector<8x32xf32>
    %269 = vector.extract_strided_slice %265 {offsets = [0, 96], sizes = [8, 32], strides = [1, 1]} : vector<8x128xf32> to vector<8x32xf32>
    %270 = arith.mulf %267, %236 : vector<8x32xf32>
    %271 = arith.mulf %266, %268 : vector<8x32xf32>
    %272 = arith.addf %270, %271 : vector<8x32xf32>
    %273 = math.tanh %272 : vector<8x32xf32>
    %274 = arith.mulf %269, %273 : vector<8x32xf32>
    %275 = vector.extract_strided_slice %10 {offsets = [56, 0], sizes = [8, 128], strides = [1, 1]} : vector<64x128xf32> to vector<8x128xf32>
    %cst_54 = arith.constant dense<0.000000e+00> : vector<8x128xf32>
    %276 = tpu.matmul %256, %11, %cst_54 {dimension_numbers = #tpu.dot_dimension_numbers<[1], [0], [0], [1], [0, 0, 1, 1], [], []>} : vector<8x32xf32>, vector<32x128xf32>, vector<8x128xf32> -> vector<8x128xf32>
    %277 = arith.addf %275, %276 : vector<8x128xf32>
    %278 = math.tanh %277 : vector<8x128xf32>
    %cst_55 = arith.constant 1.000000e+00 : f32
    %279 = vector.broadcast %cst_55 : f32 to vector<8x128xf32>
    %280 = arith.addf %278, %279 : vector<8x128xf32>
    %cst_56 = arith.constant 5.000000e-01 : f32
    %281 = vector.broadcast %cst_56 : f32 to vector<8x128xf32>
    %282 = arith.mulf %281, %280 : vector<8x128xf32>
    %283 = arith.select %21, %278, %282 : vector<8x128xi1>, vector<8x128xf32>
    %284 = vector.extract_strided_slice %283 {offsets = [0, 0], sizes = [8, 32], strides = [1, 1]} : vector<8x128xf32> to vector<8x32xf32>
    %285 = vector.extract_strided_slice %283 {offsets = [0, 32], sizes = [8, 32], strides = [1, 1]} : vector<8x128xf32> to vector<8x32xf32>
    %286 = vector.extract_strided_slice %283 {offsets = [0, 64], sizes = [8, 32], strides = [1, 1]} : vector<8x128xf32> to vector<8x32xf32>
    %287 = vector.extract_strided_slice %283 {offsets = [0, 96], sizes = [8, 32], strides = [1, 1]} : vector<8x128xf32> to vector<8x32xf32>
    %288 = arith.mulf %285, %254 : vector<8x32xf32>
    %289 = arith.mulf %284, %286 : vector<8x32xf32>
    %290 = arith.addf %288, %289 : vector<8x32xf32>
    %291 = math.tanh %290 : vector<8x32xf32>
    %292 = arith.mulf %287, %291 : vector<8x32xf32>
    %293 = tpu.concatenate %292, %274 in 1 : vector<8x32xf32>, vector<8x32xf32> -> vector<8x64xf32>
    %cst_57 = arith.constant dense<0.000000e+00> : vector<8x128xf32>
    %294 = tpu.matmul %293, %12, %cst_57 {dimension_numbers = #tpu.dot_dimension_numbers<[1], [0], [0], [1], [0, 0, 1, 1], [], []>} : vector<8x64xf32>, vector<64x128xf32>, vector<8x128xf32> -> vector<8x128xf32>
    %295 = arith.addf %294, %15 : vector<8x128xf32>
    %296 = math.tanh %295 : vector<8x128xf32>
    %cst_58 = arith.constant 1.000000e+00 : f32
    %297 = vector.broadcast %cst_58 : f32 to vector<8x128xf32>
    %298 = arith.addf %296, %297 : vector<8x128xf32>
    %cst_59 = arith.constant 5.000000e-01 : f32
    %299 = vector.broadcast %cst_59 : f32 to vector<8x128xf32>
    %300 = arith.mulf %299, %298 : vector<8x128xf32>
    %301 = arith.select %21, %296, %300 : vector<8x128xi1>, vector<8x128xf32>
    %302 = vector.extract_strided_slice %301 {offsets = [0, 0], sizes = [8, 32], strides = [1, 1]} : vector<8x128xf32> to vector<8x32xf32>
    %303 = vector.extract_strided_slice %301 {offsets = [0, 32], sizes = [8, 32], strides = [1, 1]} : vector<8x128xf32> to vector<8x32xf32>
    %304 = vector.extract_strided_slice %301 {offsets = [0, 64], sizes = [8, 32], strides = [1, 1]} : vector<8x128xf32> to vector<8x32xf32>
    %305 = vector.extract_strided_slice %301 {offsets = [0, 96], sizes = [8, 32], strides = [1, 1]} : vector<8x128xf32> to vector<8x32xf32>
    %306 = arith.mulf %303, %272 : vector<8x32xf32>
    %307 = arith.mulf %302, %304 : vector<8x32xf32>
    %308 = arith.addf %306, %307 : vector<8x32xf32>
    %309 = math.tanh %308 : vector<8x32xf32>
    %310 = arith.mulf %305, %309 : vector<8x32xf32>
    %311 = tpu.concatenate %58, %94, %130, %166, %202, %238, %274, %310 in 0 : vector<8x32xf32>, vector<8x32xf32>, vector<8x32xf32>, vector<8x32xf32>, vector<8x32xf32>, vector<8x32xf32>, vector<8x32xf32>, vector<8x32xf32> -> vector<64x32xf32>
    %c0_60 = arith.constant 0 : index
    %c0_61 = arith.constant 0 : index
    %312 = vector.load %arg7[%c0_60, %c0_61] : memref<32x128xf32, #tpu.memory_space<vmem>>, vector<32x128xf32>
    %cst_62 = arith.constant dense<0.000000e+00> : vector<64x128xf32>
    %313 = tpu.matmul %311, %312, %cst_62 {dimension_numbers = #tpu.dot_dimension_numbers<[1], [0], [0], [1], [0, 0, 1, 1], [], []>} : vector<64x32xf32>, vector<32x128xf32>, vector<64x128xf32> -> vector<64x128xf32>
    %c0_63 = arith.constant 0 : index
    %c0_64 = arith.constant 0 : index
    %314 = vector.load %arg8[%c0_63, %c0_64] : memref<1x128xf32, #tpu.memory_space<vmem>>, vector<1x128xf32>
    %315 = vector.broadcast %314 : vector<1x128xf32> to vector<64x128xf32>
    %316 = arith.addf %313, %315 : vector<64x128xf32>
    %cst_65 = arith.constant dense<0xFF800000> : vector<64xf32>
    %317 = vector.multi_reduction <maximumf>, %316, %cst_65 [1] : vector<64x128xf32> to vector<64xf32>
    %318 = vector.shape_cast %317 : vector<64xf32> to vector<64x1xf32>
    %319 = vector.broadcast %318 : vector<64x1xf32> to vector<64x128xf32>
    %320 = arith.subf %316, %319 : vector<64x128xf32>
    %321 = math.exp %320 : vector<64x128xf32>
    %cst_66 = arith.constant dense<0.000000e+00> : vector<64xf32>
    %322 = vector.multi_reduction <add>, %321, %cst_66 [1] : vector<64x128xf32> to vector<64xf32>
    %323 = vector.shape_cast %322 : vector<64xf32> to vector<64x1xf32>
    %324 = math.log %323 : vector<64x1xf32>
    %325 = arith.addf %318, %324 : vector<64x1xf32>
    %326 = vector.broadcast %325 : vector<64x1xf32> to vector<64x128xf32>
    %327 = arith.subf %316, %326 : vector<64x128xf32>
    %c0_67 = arith.constant 0 : index
    %c0_68 = arith.constant 0 : index
    %328 = vector.load %arg9[%c0_67, %c0_68] : memref<64x128xf32, #tpu.memory_space<vmem>>, vector<64x128xf32>
    tpu.vector_store %arg9[%c0_67, %c0_68], %327 {strides = array<i32>} : memref<64x128xf32, #tpu.memory_space<vmem>>, vector<64x128xf32>,
    %c0_69 = arith.constant 0 : index
    %c0_70 = arith.constant 0 : index
    %329 = vector.load %arg1[%c0_69, %c0_70] : memref<64x1xi32, #tpu.memory_space<vmem>>, vector<64x1xi32>
    %330 = tpu.iota {dimensions = array<i32: 1>} : vector<64x128xi32>
    %331 = vector.broadcast %329 : vector<64x1xi32> to vector<64x128xi32>
    %332 = arith.cmpi eq, %330, %331 : vector<64x128xi32>
    %cst_71 = arith.constant 0.000000e+00 : f32
    %333 = vector.broadcast %cst_71 : f32 to vector<64x128xf32>
    %334 = arith.select %332, %327, %333 : vector<64x128xi1>, vector<64x128xf32>
    %cst_72 = arith.constant dense<0.000000e+00> : vector<64xf32>
    %335 = vector.multi_reduction <add>, %334, %cst_72 [1] : vector<64x128xf32> to vector<64xf32>
    %336 = vector.shape_cast %335 : vector<64xf32> to vector<64x1xf32>
    %cst_73 = arith.constant 0.000000e+00 : f32
    %337 = vector.broadcast %cst_73 : f32 to vector<64x1xf32>
    %338 = arith.subf %337, %336 : vector<64x1xf32>
    %c0_i32 = arith.constant 0 : i32
    %339 = vector.broadcast %c0_i32 : i32 to vector<64x1xi32>
    %340 = arith.cmpi eq, %329, %339 : vector<64x1xi32>
    %cst_74 = arith.constant 0.000000e+00 : f32
    %341 = vector.broadcast %cst_74 : f32 to vector<64x1xf32>
    %342 = arith.select %340, %341, %338 : vector<64x1xi1>, vector<64x1xf32>
    %c0_75 = arith.constant 0 : index
    %c0_76 = arith.constant 0 : index
    %343 = vector.load %arg10[%c0_75, %c0_76] : memref<64x1xf32, #tpu.memory_space<vmem>>, vector<64x1xf32>
    tpu.vector_store %arg10[%c0_75, %c0_76], %342 {strides = array<i32>} : memref<64x1xf32, #tpu.memory_space<vmem>>, vector<64x1xf32>,
    return
  }
}

</mosaic_0001>

<llo_original>
// kernel: tpu_custom_call.1
$region0: #{tpu_custom_call.1}
  #allocation0 [shape = 'u32[]', space=smem, size = 0x4, offset = 0x4, fixed_abs, tag = 'smem constant byte address 0x4 - core index']
  #allocation1 [shape = 'u32[72,128]{1,0:T(1,128)}', space=vmem, size = 0x9000, scoped, tag = 'internal scratch']
  %s0 = inlined_call_operand.vmem [shape: s32[64,1], index: 0, kind: input, shape index: {}]
  %s1 = inlined_call_operand.vmem [shape: s32[64,1], index: 1, kind: input, shape index: {}]
  %s2 = inlined_call_operand.vmem [shape: f32[32,128], index: 2, kind: input, shape index: {}]
  %s3 = inlined_call_operand.vmem [shape: f32[1,128], index: 3, kind: input, shape index: {}]
  %s4 = inlined_call_operand.vmem [shape: f32[32,128], index: 4, kind: input, shape index: {}]
  %s5 = inlined_call_operand.vmem [shape: f32[64,128], index: 5, kind: input, shape index: {}]
  %s6 = inlined_call_operand.vmem [shape: f32[1,128], index: 6, kind: input, shape index: {}]
  %s7 = inlined_call_operand.hbm [shape: f32[32,128], index: 7, kind: input, shape index: {}]
  %s8 = inlined_call_operand.vmem [shape: f32[1,128], index: 8, kind: input, shape index: {}]
  %s9 = inlined_call_operand.hbm [shape: f32[64,128], index: 9, kind: output, shape index: {0}]
  %s10 = inlined_call_operand.vmem [shape: f32[64,1], index: 10, kind: output, shape index: {1}]
  %11 = xla_tuple %s9, %s10
  %s12 = sld [smem:[#allocation0]]
  $region58: #{tpu_custom_call.1} parent=0
    _
  %s14 = ssub.s32 1, %s12
  %s15 = scalar_select 0, %s14, %s12
  $region1: #{tpu_custom_call.1} parent=0
    #allocation2 [shape = 'u8[16384]{0}', space=vmem, size = 0x4000, scoped, tag = 'input window, operand 7, single buffered']
    #allocation3 [shape = 's32[1]{0}', space=sflag, size = 0x4, scoped, tag = 'scoped memory for tpu_custom_call.1']
    #allocation4 [shape = 's32[1]{0}', space=sflag, size = 0x4, scoped, tag = 'scoped memory for tpu_custom_call.1']
    #allocation5 [shape = 'u8[32768]{0}', space=vmem, size = 0x8000, scoped, tag = 'output window, operand 0, single buffered']
    %16 = vsyncpa [#allocation3], 0
    %17 = vsyncpa [#allocation4], 0
    // Predicated region
    $region2: #{tpu_custom_call.1} parent=1 // pred_check
      _
    $region3: #{tpu_custom_call.1} parent=1 // pred_check_branch
      %19 = sbr.rel (0) target = $region5
    $region4: #{tpu_custom_call.1} parent=1 // pred_region
      _
    $region5: #{tpu_custom_call.1} parent=1 // pred_fallthru
      _
    // Predicated region
    $region6: #{tpu_custom_call.1} parent=1 // pred_check
      _
    $region7: #{tpu_custom_call.1} parent=1 // pred_check_branch
      %21 = sbr.rel (0) target = $region9
    $region8: #{tpu_custom_call.1} parent=1 // pred_region
      _
    $region9: #{tpu_custom_call.1} parent=1 // pred_fallthru
      _
    // Predicated region
    $region10: #{tpu_custom_call.1} parent=1 // pred_check
      _
    $region11: #{tpu_custom_call.1} parent=1 // pred_check_branch
      %23 = sbr.rel (0) target = $region13
    $region12: #{tpu_custom_call.1} parent=1 // pred_region
      _
    $region13: #{tpu_custom_call.1} parent=1 // pred_fallthru
      _
    // Predicated region
    $region14: #{tpu_custom_call.1} parent=1 // pred_check
      _
    $region15: #{tpu_custom_call.1} parent=1 // pred_check_branch
      %25 = sbr.rel (0) target = $region17
    $region16: #{tpu_custom_call.1} parent=1 // pred_region
      _
    $region17: #{tpu_custom_call.1} parent=1 // pred_fallthru
      _
    // Predicated region
    $region18: #{tpu_custom_call.1} parent=1 // pred_check
      _
    $region19: #{tpu_custom_call.1} parent=1 // pred_check_branch
      %27 = sbr.rel (0) target = $region21
    $region20: #{tpu_custom_call.1} parent=1 // pred_region
      _
    $region21: #{tpu_custom_call.1} parent=1 // pred_fallthru
      _
    // Predicated region
    $region22: #{tpu_custom_call.1} parent=1 // pred_check
      _
    $region23: #{tpu_custom_call.1} parent=1 // pred_check_branch
      %29 = sbr.rel (0) target = $region25
    $region24: #{tpu_custom_call.1} parent=1 // pred_region
      _
    $region25: #{tpu_custom_call.1} parent=1 // pred_fallthru
      _
    // Predicated region
    $region26: #{tpu_custom_call.1} parent=1 // pred_check
      _
    $region27: #{tpu_custom_call.1} parent=1 // pred_check_branch
      %31 = sbr.rel (0) target = $region29
    $region28: #{tpu_custom_call.1} parent=1 // pred_region
      _
    $region29: #{tpu_custom_call.1} parent=1 // pred_fallthru
      _
    // Predicated region
    $region30: #{tpu_custom_call.1} parent=1 // pred_check
      _
    $region31: #{tpu_custom_call.1} parent=1 // pred_check_branch
      %33 = sbr.rel (0) target = $region33
    $region32: #{tpu_custom_call.1} parent=1 // pred_region
      %35 = vsyncadd [#allocation3], 0
      %s36 = sshll.u32 %s7, 4
      %s37 = int_to_ptr.hbm [resolvable:$true] %s36
      %s38 = sshll.u32 [#allocation2], 4
      %s39 = int_to_ptr.vmem [resolvable:$true] %s38
      %44 = dma.hbm_to_vmem [thread:$0]  %s37, 512, %s39, [#allocation3], 128, 128, 8
    $region33: #{tpu_custom_call.1} parent=1 // pred_fallthru
      _
    // Predicated region
    $region34: #{tpu_custom_call.1} parent=1 // pred_check
      _
    $region35: #{tpu_custom_call.1} parent=1 // pred_check_branch
      %46 = sbr.rel (0) target = $region37
    $region36: #{tpu_custom_call.1} parent=1 // pred_region
      _
    $region37: #{tpu_custom_call.1} parent=1 // pred_fallthru
      _
    // Predicated region
    $region38: #{tpu_custom_call.1} parent=1 // pred_check
      _
    $region39: #{tpu_custom_call.1} parent=1 // pred_check_branch
      %48 = sbr.rel (0) target = $region41
    $region40: #{tpu_custom_call.1} parent=1 // pred_region
      %50 = dma.done [#allocation3], 512
    $region41: #{tpu_custom_call.1} parent=1 // pred_fallthru
      _
    %v51 = vlaneseq
    %v52 = vand.u32 %v51, 127
    %v53 = vld [vmem:[%s0] sm:$0xff]
    %v54 = vld [vmem:[%s0 + $0x8] sm:$0xff]
    %v55 = vld [vmem:[%s0 + $0x10] sm:$0xff]
    %v56 = vld [vmem:[%s0 + $0x18] sm:$0xff]
    %v57 = vld [vmem:[%s0 + $0x20] sm:$0xff]
    %v58 = vld [vmem:[%s0 + $0x28] sm:$0xff]
    %v59 = vld [vmem:[%s0 + $0x30] sm:$0xff]
    %v60 = vld [vmem:[%s0 + $0x38] sm:$0xff]
    %61 = vset.pattern.permute.xlu0 0
    %62 = vperm.xlu0 %61, %v53
    %v63 = vpop.permute.xlu0 %62
    %64 = vset.pattern.permute.xlu0 0
    %65 = vperm.xlu0 %64, %v54
    %v66 = vpop.permute.xlu0 %65
    %67 = vset.pattern.permute.xlu0 0
    %68 = vperm.xlu0 %67, %v55
    %v69 = vpop.permute.xlu0 %68
    %70 = vset.pattern.permute.xlu0 0
    %71 = vperm.xlu0 %70, %v56
    %v72 = vpop.permute.xlu0 %71
    %73 = vset.pattern.permute.xlu0 0
    %74 = vperm.xlu0 %73, %v57
    %v75 = vpop.permute.xlu0 %74
    %76 = vset.pattern.permute.xlu0 0
    %77 = vperm.xlu0 %76, %v58
    %v78 = vpop.permute.xlu0 %77
    %79 = vset.pattern.permute.xlu0 0
    %80 = vperm.xlu0 %79, %v59
    %v81 = vpop.permute.xlu0 %80
    %82 = vset.pattern.permute.xlu0 0
    %83 = vperm.xlu0 %82, %v60
    %v84 = vpop.permute.xlu0 %83
    %vm85 = vcmp.eq.s32.totalorder %v52, %v63
    %vm86 = vcmp.eq.s32.totalorder %v52, %v66
    %vm87 = vcmp.eq.s32.totalorder %v52, %v69
    %vm88 = vcmp.eq.s32.totalorder %v52, %v72
    %vm89 = vcmp.eq.s32.totalorder %v52, %v75
    %vm90 = vcmp.eq.s32.totalorder %v52, %v78
    %vm91 = vcmp.eq.s32.totalorder %v52, %v81
    %vm92 = vcmp.eq.s32.totalorder %v52, %v84
    %v93 = vsel %vm85, 1, 0
    %v94 = vsel %vm86, 1, 0
    %v95 = vsel %vm87, 1, 0
    %v96 = vsel %vm88, 1, 0
    %v97 = vsel %vm89, 1, 0
    %v98 = vsel %vm90, 1, 0
    %v99 = vsel %vm91, 1, 0
    %v100 = vsel %vm92, 1, 0
    %v101 = vcvt.s32.f32 %v93
    %v102 = vcvt.s32.f32 %v94
    %v103 = vcvt.s32.f32 %v95
    %v104 = vcvt.s32.f32 %v96
    %v105 = vcvt.s32.f32 %v97
    %v106 = vcvt.s32.f32 %v98
    %v107 = vcvt.s32.f32 %v99
    %v108 = vcvt.s32.f32 %v100
    %v109 = vld [vmem:[%s2] sm:$0xff]
    %v110 = vld [vmem:[%s2 + $0x8] sm:$0xff]
    %v111 = vld [vmem:[%s2 + $0x10] sm:$0xff]
    %v112 = vld [vmem:[%s2 + $0x18] sm:$0xff]
    %v113 = vld [vmem:[%s3] sm:$0x1]
    %v115 = vperm.slane %v113, 0
    %vm117 = vcmask 261120
    %v119 = vsel %vm117, %v101, 0
    %v122 = vsel %vm117, %v102, 0
    %v125 = vsel %vm117, %v103, 0
    %v128 = vsel %vm117, %v104, 0
    %v131 = vsel %vm117, %v105, 0
    %v134 = vsel %vm117, %v106, 0
    %v137 = vsel %vm117, %v107, 0
    %v140 = vsel %vm117, %v108, 0
    %142 = vmatpush.msra.mxu0 0.0
    %143 = vmatpush.msra.mxu0 0.0
    %144 = vmatpush.msra.mxu0 0.0
    %145 = vmatpush.msra.mxu0 0.0
    %146 = vmatpush.msra.mxu0 0.0
    %147 = vmatpush.msra.mxu0 0.0
    %148 = vmatpush.msra.mxu0 0.0
    %149 = vmatpush.msra.mxu0 0.0
    %150 = vmatpush.msra.mxu0 0.0
    %151 = vmatpush.msra.mxu0 0.0
    %152 = vmatpush.msra.mxu0 0.0
    %153 = vmatpush.msra.mxu0 0.0
    %154 = vmatpush.msra.mxu0 %v112
    %155 = vmatpush.msra.mxu0 %v111
    %156 = vmatpush.msra.mxu0 %v110
    %157 = vmatpush.msra.mxu0 %v109
    %158 = vmatmul.f32.gmra.mxu0 %v119
    %v159 = vpop.f32.mrf.mxu0
    %v160 = vadd.f32 %v115, %v159
    %161 = vmatmul.f32.gmra.mxu0 %v122
    %v162 = vpop.f32.mrf.mxu0
    %v163 = vadd.f32 %v115, %v162
    %164 = vmatmul.f32.gmra.mxu0 %v125
    %v165 = vpop.f32.mrf.mxu0
    %v166 = vadd.f32 %v115, %v165
    %167 = vmatmul.f32.gmra.mxu0 %v128
    %v168 = vpop.f32.mrf.mxu0
    %v169 = vadd.f32 %v115, %v168
    %170 = vmatmul.f32.gmra.mxu0 %v131
    %v171 = vpop.f32.mrf.mxu0
    %v172 = vadd.f32 %v115, %v171
    %173 = vmatmul.f32.gmra.mxu0 %v134
    %v174 = vpop.f32.mrf.mxu0
    %v175 = vadd.f32 %v115, %v174
    %176 = vmatmul.f32.gmra.mxu0 %v137
    %v177 = vpop.f32.mrf.mxu0
    %v178 = vadd.f32 %v115, %v177
    %179 = vmatmul.f32.gmra.mxu0 %v140
    %v180 = vpop.f32.mrf.mxu0
    %v181 = vadd.f32 %v115, %v180
    %182 = vdwg.mxu0
    %v183 = vld [vmem:[%s4] sm:$0xff]
    %v184 = vld [vmem:[%s4 + $0x8] sm:$0xff]
    %v185 = vld [vmem:[%s4 + $0x10] sm:$0xff]
    %v186 = vld [vmem:[%s4 + $0x18] sm:$0xff]
    %v187 = vld [vmem:[%s5] sm:$0xff]
    %v188 = vld [vmem:[%s5 + $0x8] sm:$0xff]
    %v189 = vld [vmem:[%s5 + $0x10] sm:$0xff]
    %v190 = vld [vmem:[%s5 + $0x18] sm:$0xff]
    %v191 = vld [vmem:[%s5 + $0x20] sm:$0xff]
    %v192 = vld [vmem:[%s5 + $0x28] sm:$0xff]
    %v193 = vld [vmem:[%s5 + $0x30] sm:$0xff]
    %v194 = vld [vmem:[%s5 + $0x38] sm:$0xff]
    %v195 = vld [vmem:[%s6] sm:$0x1]
    %v197 = vperm.slane %v195, 0
    %vm199 = vcmp.ge.s32.totalorder %v52, 64
    %vm200 = vcmp.lt.s32.totalorder %v52, 96
    %vm201 = vmand %vm199, %vm200
    %v203 = vsel %vm117, 0.0, 0
    %205 = vmatpush.msra.mxu0 0.0
    %206 = vmatpush.msra.mxu0 0.0
    %207 = vmatpush.msra.mxu0 0.0
    %208 = vmatpush.msra.mxu0 0.0
    %209 = vmatpush.msra.mxu0 0.0
    %210 = vmatpush.msra.mxu0 0.0
    %211 = vmatpush.msra.mxu0 0.0
    %212 = vmatpush.msra.mxu0 0.0
    %213 = vmatpush.msra.mxu0 0.0
    %214 = vmatpush.msra.mxu0 0.0
    %215 = vmatpush.msra.mxu0 0.0
    %216 = vmatpush.msra.mxu0 0.0
    %217 = vmatpush.msra.mxu0 %v186
    %218 = vmatpush.msra.mxu0 %v185
    %219 = vmatpush.msra.mxu0 %v184
    %220 = vmatpush.msra.mxu0 %v183
    %221 = vmatmul.f32.gmra.mxu0 %v203
    %v222 = vpop.f32.mrf.mxu0
    %v223 = vadd.f32 0.0, %v222
    %224 = vdwg.mxu0
    %v225 = vadd.f32 %v160, %v223
    %v226 = vtanh.pop %v225
    %v227 = vadd.f32 %v226, 1.0
    %v228 = vmul.f32 %v227, 0.5
    %v229 = vsel %vm201, %v226, %v228
    %v230 = vmul.f32 %v229, 0.0
    %232 = vrot.lane.b32.xlu0 %v229, 64
    %v233 = vpop.permute.xlu0 %232
    %v235 = vmul.f32 %v229, %v233
    %237 = vrot.lane.b32.xlu0 %v235, 32
    %v238 = vpop.permute.xlu0 %237
    %v240 = vadd.f32 %v230, %v238
    %v241 = vtanh.pop %v240
    %243 = vrot.lane.b32.xlu0 %v241, 64
    %v244 = vpop.permute.xlu0 %243
    %v246 = vmul.f32 %v229, %v244
    %248 = vrot.lane.b32.xlu0 %v246, 32
    %v249 = vpop.permute.xlu0 %248
    %v251 = vsel %vm117, %v249, 0.0
    %vm252 = vcmask 523264
    %v254 = vsel %vm252, %v251, 0
    %256 = vmatpush.msra.mxu0 0.0
    %257 = vmatpush.msra.mxu0 0.0
    %258 = vmatpush.msra.mxu0 0.0
    %259 = vmatpush.msra.mxu0 0.0
    %260 = vmatpush.msra.mxu0 0.0
    %261 = vmatpush.msra.mxu0 0.0
    %262 = vmatpush.msra.mxu0 0.0
    %263 = vmatpush.msra.mxu0 0.0
    %264 = vmatpush.msra.mxu0 %v194
    %265 = vmatpush.msra.mxu0 %v193
    %266 = vmatpush.msra.mxu0 %v192
    %267 = vmatpush.msra.mxu0 %v191
    %268 = vmatpush.msra.mxu0 %v190
    %269 = vmatpush.msra.mxu0 %v189
    %270 = vmatpush.msra.mxu0 %v188
    %271 = vmatpush.msra.mxu0 %v187
    %272 = vmatmul.f32.gmra.mxu0 %v254
    %v273 = vpop.f32.mrf.mxu0
    %v274 = vadd.f32 %v197, %v273
    %275 = vdwg.mxu0
    %v276 = vtanh.pop %v274
    %v277 = vadd.f32 %v276, 1.0
    %v278 = vmul.f32 %v277, 0.5
    %v279 = vsel %vm201, %v276, %v278
    %v280 = vmul.f32 %v279, 0.0
    %282 = vrot.lane.b32.xlu0 %v279, 64
    %v283 = vpop.permute.xlu0 %282
    %v285 = vmul.f32 %v279, %v283
    %287 = vrot.lane.b32.xlu0 %v285, 32
    %v288 = vpop.permute.xlu0 %287
    %v290 = vadd.f32 %v280, %v288
    %v291 = vtanh.pop %v290
    %293 = vrot.lane.b32.xlu0 %v291, 64
    %v294 = vpop.permute.xlu0 %293
    %v296 = vmul.f32 %v279, %v294
    %v297 = vsel %vm117, %v249, 0
    %299 = vmatpush.msra.mxu0 0.0
    %300 = vmatpush.msra.mxu0 0.0
    %301 = vmatpush.msra.mxu0 0.0
    %302 = vmatpush.msra.mxu0 0.0
    %303 = vmatpush.msra.mxu0 0.0
    %304 = vmatpush.msra.mxu0 0.0
    %305 = vmatpush.msra.mxu0 0.0
    %306 = vmatpush.msra.mxu0 0.0
    %307 = vmatpush.msra.mxu0 0.0
    %308 = vmatpush.msra.mxu0 0.0
    %309 = vmatpush.msra.mxu0 0.0
    %310 = vmatpush.msra.mxu0 0.0
    %311 = vmatpush.msra.mxu0 %v186
    %312 = vmatpush.msra.mxu0 %v185
    %313 = vmatpush.msra.mxu0 %v184
    %314 = vmatpush.msra.mxu0 %v183
    %315 = vmatmul.f32.gmra.mxu0 %v297
    %v316 = vpop.f32.mrf.mxu0
    %v317 = vadd.f32 0.0, %v316
    %318 = vdwg.mxu0
    %v319 = vadd.f32 %v163, %v317
    %v320 = vtanh.pop %v319
    %v321 = vadd.f32 %v320, 1.0
    %v322 = vmul.f32 %v321, 0.5
    %v323 = vsel %vm201, %v320, %v322
    %v324 = vmul.f32 %v323, %v240
    %326 = vrot.lane.b32.xlu0 %v323, 64
    %v327 = vpop.permute.xlu0 %326
    %v329 = vmul.f32 %v323, %v327
    %331 = vrot.lane.b32.xlu0 %v329, 32
    %v332 = vpop.permute.xlu0 %331
    %v334 = vadd.f32 %v324, %v332
    %v335 = vtanh.pop %v334
    %337 = vrot.lane.b32.xlu0 %v335, 64
    %v338 = vpop.permute.xlu0 %337
    %v340 = vmul.f32 %v323, %v338
    %342 = vrot.lane.b32.xlu0 %v340, 32
    %v343 = vpop.permute.xlu0 %342
    %346 = vrot.lane.b32.xlu0 %v296, 64
    %v347 = vpop.permute.xlu0 %346
    %v349 = vsel %vm117, %v343, %v347
    %v351 = vsel %vm252, %v349, 0
    %353 = vmatpush.msra.mxu0 0.0
    %354 = vmatpush.msra.mxu0 0.0
    %355 = vmatpush.msra.mxu0 0.0
    %356 = vmatpush.msra.mxu0 0.0
    %357 = vmatpush.msra.mxu0 0.0
    %358 = vmatpush.msra.mxu0 0.0
    %359 = vmatpush.msra.mxu0 0.0
    %360 = vmatpush.msra.mxu0 0.0
    %361 = vmatpush.msra.mxu0 %v194
    %362 = vmatpush.msra.mxu0 %v193
    %363 = vmatpush.msra.mxu0 %v192
    %364 = vmatpush.msra.mxu0 %v191
    %365 = vmatpush.msra.mxu0 %v190
    %366 = vmatpush.msra.mxu0 %v189
    %367 = vmatpush.msra.mxu0 %v188
    %368 = vmatpush.msra.mxu0 %v187
    %369 = vmatmul.f32.gmra.mxu0 %v351
    %v370 = vpop.f32.mrf.mxu0
    %v371 = vadd.f32 %v197, %v370
    %372 = vdwg.mxu0
    %v373 = vtanh.pop %v371
    %v374 = vadd.f32 %v373, 1.0
    %v375 = vmul.f32 %v374, 0.5
    %v376 = vsel %vm201, %v373, %v375
    %v377 = vmul.f32 %v376, %v290
    %379 = vrot.lane.b32.xlu0 %v376, 64
    %v380 = vpop.permute.xlu0 %379
    %v382 = vmul.f32 %v376, %v380
    %384 = vrot.lane.b32.xlu0 %v382, 32
    %v385 = vpop.permute.xlu0 %384
    %v387 = vadd.f32 %v377, %v385
    %v388 = vtanh.pop %v387
    %390 = vrot.lane.b32.xlu0 %v388, 64
    %v391 = vpop.permute.xlu0 %390
    %v393 = vmul.f32 %v376, %v391
    %v394 = vsel %vm117, %v343, 0
    %396 = vmatpush.msra.mxu0 0.0
    %397 = vmatpush.msra.mxu0 0.0
    %398 = vmatpush.msra.mxu0 0.0
    %399 = vmatpush.msra.mxu0 0.0
    %400 = vmatpush.msra.mxu0 0.0
    %401 = vmatpush.msra.mxu0 0.0
    %402 = vmatpush.msra.mxu0 0.0
    %403 = vmatpush.msra.mxu0 0.0
    %404 = vmatpush.msra.mxu0 0.0
    %405 = vmatpush.msra.mxu0 0.0
    %406 = vmatpush.msra.mxu0 0.0
    %407 = vmatpush.msra.mxu0 0.0
    %408 = vmatpush.msra.mxu0 %v186
    %409 = vmatpush.msra.mxu0 %v185
    %410 = vmatpush.msra.mxu0 %v184
    %411 = vmatpush.msra.mxu0 %v183
    %412 = vmatmul.f32.gmra.mxu0 %v394
    %v413 = vpop.f32.mrf.mxu0
    %v414 = vadd.f32 0.0, %v413
    %415 = vdwg.mxu0
    %v416 = vadd.f32 %v166, %v414
    %v417 = vtanh.pop %v416
    %v418 = vadd.f32 %v417, 1.0
    %v419 = vmul.f32 %v418, 0.5
    %v420 = vsel %vm201, %v417, %v419
    %v421 = vmul.f32 %v420, %v334
    %423 = vrot.lane.b32.xlu0 %v420, 64
    %v424 = vpop.permute.xlu0 %423
    %v426 = vmul.f32 %v420, %v424
    %428 = vrot.lane.b32.xlu0 %v426, 32
    %v429 = vpop.permute.xlu0 %428
    %v431 = vadd.f32 %v421, %v429
    %v432 = vtanh.pop %v431
    %434 = vrot.lane.b32.xlu0 %v432, 64
    %v435 = vpop.permute.xlu0 %434
    %v437 = vmul.f32 %v420, %v435
    %439 = vrot.lane.b32.xlu0 %v437, 32
    %v440 = vpop.permute.xlu0 %439
    %443 = vrot.lane.b32.xlu0 %v393, 64
    %v444 = vpop.permute.xlu0 %443
    %v446 = vsel %vm117, %v440, %v444
    %v448 = vsel %vm252, %v446, 0
    %450 = vmatpush.msra.mxu0 0.0
    %451 = vmatpush.msra.mxu0 0.0
    %452 = vmatpush.msra.mxu0 0.0
    %453 = vmatpush.msra.mxu0 0.0
    %454 = vmatpush.msra.mxu0 0.0
    %455 = vmatpush.msra.mxu0 0.0
    %456 = vmatpush.msra.mxu0 0.0
    %457 = vmatpush.msra.mxu0 0.0
    %458 = vmatpush.msra.mxu0 %v194
    %459 = vmatpush.msra.mxu0 %v193
    %460 = vmatpush.msra.mxu0 %v192
    %461 = vmatpush.msra.mxu0 %v191
    %462 = vmatpush.msra.mxu0 %v190
    %463 = vmatpush.msra.mxu0 %v189
    %464 = vmatpush.msra.mxu0 %v188
    %465 = vmatpush.msra.mxu0 %v187
    %466 = vmatmul.f32.gmra.mxu0 %v448
    %v467 = vpop.f32.mrf.mxu0
    %v468 = vadd.f32 %v197, %v467
    %469 = vdwg.mxu0
    %v470 = vtanh.pop %v468
    %v471 = vadd.f32 %v470, 1.0
    %v472 = vmul.f32 %v471, 0.5
    %v473 = vsel %vm201, %v470, %v472
    %v474 = vmul.f32 %v473, %v387
    %476 = vrot.lane.b32.xlu0 %v473, 64
    %v477 = vpop.permute.xlu0 %476
    %v479 = vmul.f32 %v473, %v477
    %481 = vrot.lane.b32.xlu0 %v479, 32
    %v482 = vpop.permute.xlu0 %481
    %v484 = vadd.f32 %v474, %v482
    %v485 = vtanh.pop %v484
    %487 = vrot.lane.b32.xlu0 %v485, 64
    %v488 = vpop.permute.xlu0 %487
    %v490 = vmul.f32 %v473, %v488
    %v491 = vsel %vm117, %v440, 0
    %493 = vmatpush.msra.mxu0 0.0
    %494 = vmatpush.msra.mxu0 0.0
    %495 = vmatpush.msra.mxu0 0.0
    %496 = vmatpush.msra.mxu0 0.0
    %497 = vmatpush.msra.mxu0 0.0
    %498 = vmatpush.msra.mxu0 0.0
    %499 = vmatpush.msra.mxu0 0.0
    %500 = vmatpush.msra.mxu0 0.0
    %501 = vmatpush.msra.mxu0 0.0
    %502 = vmatpush.msra.mxu0 0.0
    %503 = vmatpush.msra.mxu0 0.0
    %504 = vmatpush.msra.mxu0 0.0
    %505 = vmatpush.msra.mxu0 %v186
    %506 = vmatpush.msra.mxu0 %v185
    %507 = vmatpush.msra.mxu0 %v184
    %508 = vmatpush.msra.mxu0 %v183
    %509 = vmatmul.f32.gmra.mxu0 %v491
    %v510 = vpop.f32.mrf.mxu0
    %v511 = vadd.f32 0.0, %v510
    %512 = vdwg.mxu0
    %v513 = vadd.f32 %v169, %v511
    %v514 = vtanh.pop %v513
    %v515 = vadd.f32 %v514, 1.0
    %v516 = vmul.f32 %v515, 0.5
    %v517 = vsel %vm201, %v514, %v516
    %v518 = vmul.f32 %v517, %v431
    %520 = vrot.lane.b32.xlu0 %v517, 64
    %v521 = vpop.permute.xlu0 %520
    %v523 = vmul.f32 %v517, %v521
    %525 = vrot.lane.b32.xlu0 %v523, 32
    %v526 = vpop.permute.xlu0 %525
    %v528 = vadd.f32 %v518, %v526
    %v529 = vtanh.pop %v528
    %531 = vrot.lane.b32.xlu0 %v529, 64
    %v532 = vpop.permute.xlu0 %531
    %v534 = vmul.f32 %v517, %v532
    %536 = vrot.lane.b32.xlu0 %v534, 32
    %v537 = vpop.permute.xlu0 %536
    %540 = vrot.lane.b32.xlu0 %v490, 64
    %v541 = vpop.permute.xlu0 %540
    %v543 = vsel %vm117, %v537, %v541
    %v545 = vsel %vm252, %v543, 0
    %547 = vmatpush.msra.mxu0 0.0
    %548 = vmatpush.msra.mxu0 0.0
    %549 = vmatpush.msra.mxu0 0.0
    %550 = vmatpush.msra.mxu0 0.0
    %551 = vmatpush.msra.mxu0 0.0
    %552 = vmatpush.msra.mxu0 0.0
    %553 = vmatpush.msra.mxu0 0.0
    %554 = vmatpush.msra.mxu0 0.0
    %555 = vmatpush.msra.mxu0 %v194
    %556 = vmatpush.msra.mxu0 %v193
    %557 = vmatpush.msra.mxu0 %v192
    %558 = vmatpush.msra.mxu0 %v191
    %559 = vmatpush.msra.mxu0 %v190
    %560 = vmatpush.msra.mxu0 %v189
    %561 = vmatpush.msra.mxu0 %v188
    %562 = vmatpush.msra.mxu0 %v187
    %563 = vmatmul.f32.gmra.mxu0 %v545
    %v564 = vpop.f32.mrf.mxu0
    %v565 = vadd.f32 %v197, %v564
    %566 = vdwg.mxu0
    %v567 = vtanh.pop %v565
    %v568 = vadd.f32 %v567, 1.0
    %v569 = vmul.f32 %v568, 0.5
    %v570 = vsel %vm201, %v567, %v569
    %v571 = vmul.f32 %v570, %v484
    %573 = vrot.lane.b32.xlu0 %v570, 64
    %v574 = vpop.permute.xlu0 %573
    %v576 = vmul.f32 %v570, %v574
    %578 = vrot.lane.b32.xlu0 %v576, 32
    %v579 = vpop.permute.xlu0 %578
    %v581 = vadd.f32 %v571, %v579
    %v582 = vtanh.pop %v581
    %584 = vrot.lane.b32.xlu0 %v582, 64
    %v585 = vpop.permute.xlu0 %584
    %v587 = vmul.f32 %v570, %v585
    %v588 = vsel %vm117, %v537, 0
    %590 = vmatpush.msra.mxu0 0.0
    %591 = vmatpush.msra.mxu0 0.0
    %592 = vmatpush.msra.mxu0 0.0
    %593 = vmatpush.msra.mxu0 0.0
    %594 = vmatpush.msra.mxu0 0.0
    %595 = vmatpush.msra.mxu0 0.0
    %596 = vmatpush.msra.mxu0 0.0
    %597 = vmatpush.msra.mxu0 0.0
    %598 = vmatpush.msra.mxu0 0.0
    %599 = vmatpush.msra.mxu0 0.0
    %600 = vmatpush.msra.mxu0 0.0
    %601 = vmatpush.msra.mxu0 0.0
    %602 = vmatpush.msra.mxu0 %v186
    %603 = vmatpush.msra.mxu0 %v185
    %604 = vmatpush.msra.mxu0 %v184
    %605 = vmatpush.msra.mxu0 %v183
    %606 = vmatmul.f32.gmra.mxu0 %v588
    %v607 = vpop.f32.mrf.mxu0
    %v608 = vadd.f32 0.0, %v607
    %609 = vdwg.mxu0
    %v610 = vadd.f32 %v172, %v608
    %v611 = vtanh.pop %v610
    %v612 = vadd.f32 %v611, 1.0
    %v613 = vmul.f32 %v612, 0.5
    %v614 = vsel %vm201, %v611, %v613
    %v615 = vmul.f32 %v614, %v528
    %617 = vrot.lane.b32.xlu0 %v614, 64
    %v618 = vpop.permute.xlu0 %617
    %v620 = vmul.f32 %v614, %v618
    %622 = vrot.lane.b32.xlu0 %v620, 32
    %v623 = vpop.permute.xlu0 %622
    %v625 = vadd.f32 %v615, %v623
    %v626 = vtanh.pop %v625
    %628 = vrot.lane.b32.xlu0 %v626, 64
    %v629 = vpop.permute.xlu0 %628
    %v631 = vmul.f32 %v614, %v629
    %633 = vrot.lane.b32.xlu0 %v631, 32
    %v634 = vpop.permute.xlu0 %633
    %637 = vrot.lane.b32.xlu0 %v587, 64
    %v638 = vpop.permute.xlu0 %637
    %v640 = vsel %vm117, %v634, %v638
    %v642 = vsel %vm252, %v640, 0
    %644 = vmatpush.msra.mxu0 0.0
    %645 = vmatpush.msra.mxu0 0.0
    %646 = vmatpush.msra.mxu0 0.0
    %647 = vmatpush.msra.mxu0 0.0
    %648 = vmatpush.msra.mxu0 0.0
    %649 = vmatpush.msra.mxu0 0.0
    %650 = vmatpush.msra.mxu0 0.0
    %651 = vmatpush.msra.mxu0 0.0
    %652 = vmatpush.msra.mxu0 %v194
    %653 = vmatpush.msra.mxu0 %v193
    %654 = vmatpush.msra.mxu0 %v192
    %655 = vmatpush.msra.mxu0 %v191
    %656 = vmatpush.msra.mxu0 %v190
    %657 = vmatpush.msra.mxu0 %v189
    %658 = vmatpush.msra.mxu0 %v188
    %659 = vmatpush.msra.mxu0 %v187
    %660 = vmatmul.f32.gmra.mxu0 %v642
    %v661 = vpop.f32.mrf.mxu0
    %v662 = vadd.f32 %v197, %v661
    %663 = vdwg.mxu0
    %v664 = vtanh.pop %v662
    %v665 = vadd.f32 %v664, 1.0
    %v666 = vmul.f32 %v665, 0.5
    %v667 = vsel %vm201, %v664, %v666
    %v668 = vmul.f32 %v667, %v581
    %670 = vrot.lane.b32.xlu0 %v667, 64
    %v671 = vpop.permute.xlu0 %670
    %v673 = vmul.f32 %v667, %v671
    %675 = vrot.lane.b32.xlu0 %v673, 32
    %v676 = vpop.permute.xlu0 %675
    %v678 = vadd.f32 %v668, %v676
    %v679 = vtanh.pop %v678
    %681 = vrot.lane.b32.xlu0 %v679, 64
    %v682 = vpop.permute.xlu0 %681
    %v684 = vmul.f32 %v667, %v682
    %v685 = vsel %vm117, %v634, 0
    %687 = vmatpush.msra.mxu0 0.0
    %688 = vmatpush.msra.mxu0 0.0
    %689 = vmatpush.msra.mxu0 0.0
    %690 = vmatpush.msra.mxu0 0.0
    %691 = vmatpush.msra.mxu0 0.0
    %692 = vmatpush.msra.mxu0 0.0
    %693 = vmatpush.msra.mxu0 0.0
    %694 = vmatpush.msra.mxu0 0.0
    %695 = vmatpush.msra.mxu0 0.0
    %696 = vmatpush.msra.mxu0 0.0
    %697 = vmatpush.msra.mxu0 0.0
    %698 = vmatpush.msra.mxu0 0.0
    %699 = vmatpush.msra.mxu0 %v186
    %700 = vmatpush.msra.mxu0 %v185
    %701 = vmatpush.msra.mxu0 %v184
    %702 = vmatpush.msra.mxu0 %v183
    %703 = vmatmul.f32.gmra.mxu0 %v685
    %v704 = vpop.f32.mrf.mxu0
    %v705 = vadd.f32 0.0, %v704
    %706 = vdwg.mxu0
    %v707 = vadd.f32 %v175, %v705
    %v708 = vtanh.pop %v707
    %v709 = vadd.f32 %v708, 1.0
    %v710 = vmul.f32 %v709, 0.5
    %v711 = vsel %vm201, %v708, %v710
    %v712 = vmul.f32 %v711, %v625
    %714 = vrot.lane.b32.xlu0 %v711, 64
    %v715 = vpop.permute.xlu0 %714
    %v717 = vmul.f32 %v711, %v715
    %719 = vrot.lane.b32.xlu0 %v717, 32
    %v720 = vpop.permute.xlu0 %719
    %v722 = vadd.f32 %v712, %v720
    %v723 = vtanh.pop %v722
    %725 = vrot.lane.b32.xlu0 %v723, 64
    %v726 = vpop.permute.xlu0 %725
    %v728 = vmul.f32 %v711, %v726
    %730 = vrot.lane.b32.xlu0 %v728, 32
    %v731 = vpop.permute.xlu0 %730
    %734 = vrot.lane.b32.xlu0 %v684, 64
    %v735 = vpop.permute.xlu0 %734
    %v737 = vsel %vm117, %v731, %v735
    %v739 = vsel %vm252, %v737, 0
    %741 = vmatpush.msra.mxu0 0.0
    %742 = vmatpush.msra.mxu0 0.0
    %743 = vmatpush.msra.mxu0 0.0
    %744 = vmatpush.msra.mxu0 0.0
    %745 = vmatpush.msra.mxu0 0.0
    %746 = vmatpush.msra.mxu0 0.0
    %747 = vmatpush.msra.mxu0 0.0
    %748 = vmatpush.msra.mxu0 0.0
    %749 = vmatpush.msra.mxu0 %v194
    %750 = vmatpush.msra.mxu0 %v193
    %751 = vmatpush.msra.mxu0 %v192
    %752 = vmatpush.msra.mxu0 %v191
    %753 = vmatpush.msra.mxu0 %v190
    %754 = vmatpush.msra.mxu0 %v189
    %755 = vmatpush.msra.mxu0 %v188
    %756 = vmatpush.msra.mxu0 %v187
    %757 = vmatmul.f32.gmra.mxu0 %v739
    %v758 = vpop.f32.mrf.mxu0
    %v759 = vadd.f32 %v197, %v758
    %760 = vdwg.mxu0
    %v761 = vtanh.pop %v759
    %v762 = vadd.f32 %v761, 1.0
    %v763 = vmul.f32 %v762, 0.5
    %v764 = vsel %vm201, %v761, %v763
    %v765 = vmul.f32 %v764, %v678
    %767 = vrot.lane.b32.xlu0 %v764, 64
    %v768 = vpop.permute.xlu0 %767
    %v770 = vmul.f32 %v764, %v768
    %772 = vrot.lane.b32.xlu0 %v770, 32
    %v773 = vpop.permute.xlu0 %772
    %v775 = vadd.f32 %v765, %v773
    %v776 = vtanh.pop %v775
    %778 = vrot.lane.b32.xlu0 %v776, 64
    %v779 = vpop.permute.xlu0 %778
    %v781 = vmul.f32 %v764, %v779
    %v782 = vsel %vm117, %v731, 0
    %784 = vmatpush.msra.mxu0 0.0
    %785 = vmatpush.msra.mxu0 0.0
    %786 = vmatpush.msra.mxu0 0.0
    %787 = vmatpush.msra.mxu0 0.0
    %788 = vmatpush.msra.mxu0 0.0
    %789 = vmatpush.msra.mxu0 0.0
    %790 = vmatpush.msra.mxu0 0.0
    %791 = vmatpush.msra.mxu0 0.0
    %792 = vmatpush.msra.mxu0 0.0
    %793 = vmatpush.msra.mxu0 0.0
    %794 = vmatpush.msra.mxu0 0.0
    %795 = vmatpush.msra.mxu0 0.0
    %796 = vmatpush.msra.mxu0 %v186
    %797 = vmatpush.msra.mxu0 %v185
    %798 = vmatpush.msra.mxu0 %v184
    %799 = vmatpush.msra.mxu0 %v183
    %800 = vmatmul.f32.gmra.mxu0 %v782
    %v801 = vpop.f32.mrf.mxu0
    %v802 = vadd.f32 0.0, %v801
    %803 = vdwg.mxu0
    %v804 = vadd.f32 %v178, %v802
    %v805 = vtanh.pop %v804
    %v806 = vadd.f32 %v805, 1.0
    %v807 = vmul.f32 %v806, 0.5
    %v808 = vsel %vm201, %v805, %v807
    %v809 = vmul.f32 %v808, %v722
    %811 = vrot.lane.b32.xlu0 %v808, 64
    %v812 = vpop.permute.xlu0 %811
    %v814 = vmul.f32 %v808, %v812
    %816 = vrot.lane.b32.xlu0 %v814, 32
    %v817 = vpop.permute.xlu0 %816
    %v819 = vadd.f32 %v809, %v817
    %v820 = vtanh.pop %v819
    %822 = vrot.lane.b32.xlu0 %v820, 64
    %v823 = vpop.permute.xlu0 %822
    %v825 = vmul.f32 %v808, %v823
    %827 = vrot.lane.b32.xlu0 %v825, 32
    %v828 = vpop.permute.xlu0 %827
    %831 = vrot.lane.b32.xlu0 %v781, 64
    %v832 = vpop.permute.xlu0 %831
    %v834 = vsel %vm117, %v828, %v832
    %v836 = vsel %vm252, %v834, 0
    %838 = vmatpush.msra.mxu0 0.0
    %839 = vmatpush.msra.mxu0 0.0
    %840 = vmatpush.msra.mxu0 0.0
    %841 = vmatpush.msra.mxu0 0.0
    %842 = vmatpush.msra.mxu0 0.0
    %843 = vmatpush.msra.mxu0 0.0
    %844 = vmatpush.msra.mxu0 0.0
    %845 = vmatpush.msra.mxu0 0.0
    %846 = vmatpush.msra.mxu0 %v194
    %847 = vmatpush.msra.mxu0 %v193
    %848 = vmatpush.msra.mxu0 %v192
    %849 = vmatpush.msra.mxu0 %v191
    %850 = vmatpush.msra.mxu0 %v190
    %851 = vmatpush.msra.mxu0 %v189
    %852 = vmatpush.msra.mxu0 %v188
    %853 = vmatpush.msra.mxu0 %v187
    %854 = vmatmul.f32.gmra.mxu0 %v836
    %v855 = vpop.f32.mrf.mxu0
    %v856 = vadd.f32 %v197, %v855
    %857 = vdwg.mxu0
    %v858 = vtanh.pop %v856
    %v859 = vadd.f32 %v858, 1.0
    %v860 = vmul.f32 %v859, 0.5
    %v861 = vsel %vm201, %v858, %v860
    %v862 = vmul.f32 %v861, %v775
    %864 = vrot.lane.b32.xlu0 %v861, 64
    %v865 = vpop.permute.xlu0 %864
    %v867 = vmul.f32 %v861, %v865
    %869 = vrot.lane.b32.xlu0 %v867, 32
    %v870 = vpop.permute.xlu0 %869
    %v872 = vadd.f32 %v862, %v870
    %v873 = vtanh.pop %v872
    %875 = vrot.lane.b32.xlu0 %v873, 64
    %v876 = vpop.permute.xlu0 %875
    %v878 = vmul.f32 %v861, %v876
    %v879 = vsel %vm117, %v828, 0
    %881 = vmatpush.msra.mxu0 0.0
    %882 = vmatpush.msra.mxu0 0.0
    %883 = vmatpush.msra.mxu0 0.0
    %884 = vmatpush.msra.mxu0 0.0
    %885 = vmatpush.msra.mxu0 0.0
    %886 = vmatpush.msra.mxu0 0.0
    %887 = vmatpush.msra.mxu0 0.0
    %888 = vmatpush.msra.mxu0 0.0
    %889 = vmatpush.msra.mxu0 0.0
    %890 = vmatpush.msra.mxu0 0.0
    %891 = vmatpush.msra.mxu0 0.0
    %892 = vmatpush.msra.mxu0 0.0
    %893 = vmatpush.msra.mxu0 %v186
    %894 = vmatpush.msra.mxu0 %v185
    %895 = vmatpush.msra.mxu0 %v184
    %896 = vmatpush.msra.mxu0 %v183
    %897 = vmatmul.f32.gmra.mxu0 %v879
    %v898 = vpop.f32.mrf.mxu0
    %v899 = vadd.f32 0.0, %v898
    %900 = vdwg.mxu0
    %v901 = vadd.f32 %v181, %v899
    %v902 = vtanh.pop %v901
    %v903 = vadd.f32 %v902, 1.0
    %v904 = vmul.f32 %v903, 0.5
    %v905 = vsel %vm201, %v902, %v904
    %v906 = vmul.f32 %v905, %v819
    %908 = vrot.lane.b32.xlu0 %v905, 64
    %v909 = vpop.permute.xlu0 %908
    %v911 = vmul.f32 %v905, %v909
    %913 = vrot.lane.b32.xlu0 %v911, 32
    %v914 = vpop.permute.xlu0 %913
    %v916 = vadd.f32 %v906, %v914
    %v917 = vtanh.pop %v916
    %919 = vrot.lane.b32.xlu0 %v917, 64
    %v920 = vpop.permute.xlu0 %919
    %v922 = vmul.f32 %v905, %v920
    %924 = vrot.lane.b32.xlu0 %v922, 32
    %v925 = vpop.permute.xlu0 %924
    %928 = vrot.lane.b32.xlu0 %v878, 64
    %v929 = vpop.permute.xlu0 %928
    %v931 = vsel %vm117, %v925, %v929
    %v933 = vsel %vm252, %v931, 0
    %935 = vmatpush.msra.mxu0 0.0
    %936 = vmatpush.msra.mxu0 0.0
    %937 = vmatpush.msra.mxu0 0.0
    %938 = vmatpush.msra.mxu0 0.0
    %939 = vmatpush.msra.mxu0 0.0
    %940 = vmatpush.msra.mxu0 0.0
    %941 = vmatpush.msra.mxu0 0.0
    %942 = vmatpush.msra.mxu0 0.0
    %943 = vmatpush.msra.mxu0 %v194
    %944 = vmatpush.msra.mxu0 %v193
    %945 = vmatpush.msra.mxu0 %v192
    %946 = vmatpush.msra.mxu0 %v191
    %947 = vmatpush.msra.mxu0 %v190
    %948 = vmatpush.msra.mxu0 %v189
    %949 = vmatpush.msra.mxu0 %v188
    %950 = vmatpush.msra.mxu0 %v187
    %951 = vmatmul.f32.gmra.mxu0 %v933
    %v952 = vpop.f32.mrf.mxu0
    %v953 = vadd.f32 %v197, %v952
    %954 = vdwg.mxu0
    %v955 = vtanh.pop %v953
    %v956 = vadd.f32 %v955, 1.0
    %v957 = vmul.f32 %v956, 0.5
    %v958 = vsel %vm201, %v955, %v957
    %v959 = vmul.f32 %v958, %v872
    %961 = vrot.lane.b32.xlu0 %v958, 64
    %v962 = vpop.permute.xlu0 %961
    %v964 = vmul.f32 %v958, %v962
    %966 = vrot.lane.b32.xlu0 %v964, 32
    %v967 = vpop.permute.xlu0 %966
    %v969 = vadd.f32 %v959, %v967
    %v970 = vtanh.pop %v969
    %972 = vrot.lane.b32.xlu0 %v970, 64
    %v973 = vpop.permute.xlu0 %972
    %v975 = vmul.f32 %v958, %v973
    %v976 = vld [vmem:[#allocation2] sm:$0xff]
    %v977 = vld [vmem:[#allocation2 + $0x8] sm:$0xff]
    %v978 = vld [vmem:[#allocation2 + $0x10] sm:$0xff]
    %v979 = vld [vmem:[#allocation2 + $0x18] sm:$0xff]
    %v980 = vld [vmem:[%s8] sm:$0x1]
    %v982 = vperm.slane %v980, 0
    %985 = vrot.lane.b32.xlu0 %v296, 32
    %v986 = vpop.permute.xlu0 %985
    %987 = vrot.lane.b32.xlu0 %v393, 32
    %v988 = vpop.permute.xlu0 %987
    %989 = vrot.lane.b32.xlu0 %v490, 32
    %v990 = vpop.permute.xlu0 %989
    %991 = vrot.lane.b32.xlu0 %v587, 32
    %v992 = vpop.permute.xlu0 %991
    %993 = vrot.lane.b32.xlu0 %v684, 32
    %v994 = vpop.permute.xlu0 %993
    %995 = vrot.lane.b32.xlu0 %v781, 32
    %v996 = vpop.permute.xlu0 %995
    %997 = vrot.lane.b32.xlu0 %v878, 32
    %v998 = vpop.permute.xlu0 %997
    %999 = vrot.lane.b32.xlu0 %v975, 32
    %v1000 = vpop.permute.xlu0 %999
    %v1001 = vsel %vm117, %v986, 0
    %v1003 = vsel %vm117, %v988, 0
    %v1005 = vsel %vm117, %v990, 0
    %v1007 = vsel %vm117, %v992, 0
    %v1009 = vsel %vm117, %v994, 0
    %v1011 = vsel %vm117, %v996, 0
    %v1013 = vsel %vm117, %v998, 0
    %v1015 = vsel %vm117, %v1000, 0
    %1017 = vmatpush.msra.mxu0 0.0
    %1018 = vmatpush.msra.mxu0 0.0
    %1019 = vmatpush.msra.mxu0 0.0
    %1020 = vmatpush.msra.mxu0 0.0
    %1021 = vmatpush.msra.mxu0 0.0
    %1022 = vmatpush.msra.mxu0 0.0
    %1023 = vmatpush.msra.mxu0 0.0
    %1024 = vmatpush.msra.mxu0 0.0
    %1025 = vmatpush.msra.mxu0 0.0
    %1026 = vmatpush.msra.mxu0 0.0
    %1027 = vmatpush.msra.mxu0 0.0
    %1028 = vmatpush.msra.mxu0 0.0
    %1029 = vmatpush.msra.mxu0 %v979
    %1030 = vmatpush.msra.mxu0 %v978
    %1031 = vmatpush.msra.mxu0 %v977
    %1032 = vmatpush.msra.mxu0 %v976
    %1033 = vmatmul.f32.gmra.mxu0 %v1001
    %v1034 = vpop.f32.mrf.mxu0
    %v1035 = vadd.f32 %v982, %v1034
    %1036 = vmatmul.f32.gmra.mxu0 %v1003
    %v1037 = vpop.f32.mrf.mxu0
    %v1038 = vadd.f32 %v982, %v1037
    %1039 = vmatmul.f32.gmra.mxu0 %v1005
    %v1040 = vpop.f32.mrf.mxu0
    %v1041 = vadd.f32 %v982, %v1040
    %1042 = vmatmul.f32.gmra.mxu0 %v1007
    %v1043 = vpop.f32.mrf.mxu0
    %v1044 = vadd.f32 %v982, %v1043
    %1045 = vmatmul.f32.gmra.mxu0 %v1009
    %v1046 = vpop.f32.mrf.mxu0
    %v1047 = vadd.f32 %v982, %v1046
    %1048 = vmatmul.f32.gmra.mxu0 %v1011
    %v1049 = vpop.f32.mrf.mxu0
    %v1050 = vadd.f32 %v982, %v1049
    %1051 = vmatmul.f32.gmra.mxu0 %v1013
    %v1052 = vpop.f32.mrf.mxu0
    %v1053 = vadd.f32 %v982, %v1052
    %1054 = vmatmul.f32.gmra.mxu0 %v1015
    %v1055 = vpop.f32.mrf.mxu0
    %v1056 = vadd.f32 %v982, %v1055
    %1057 = vdwg.mxu0
    %1058 = vmax.xlane.f32.xlu0 %v1035
    %v1059 = vpop.xlane.xlu0 %1058
    %1060 = vmax.xlane.f32.xlu0 %v1038
    %v1061 = vpop.xlane.xlu0 %1060
    %1062 = vmax.xlane.f32.xlu0 %v1041
    %v1063 = vpop.xlane.xlu0 %1062
    %1064 = vmax.xlane.f32.xlu0 %v1044
    %v1065 = vpop.xlane.xlu0 %1064
    %1066 = vmax.xlane.f32.xlu0 %v1047
    %v1067 = vpop.xlane.xlu0 %1066
    %1068 = vmax.xlane.f32.xlu0 %v1050
    %v1069 = vpop.xlane.xlu0 %1068
    %1070 = vmax.xlane.f32.xlu0 %v1053
    %v1071 = vpop.xlane.xlu0 %1070
    %1072 = vmax.xlane.f32.xlu0 %v1056
    %v1073 = vpop.xlane.xlu0 %1072
    %v1074 = vsub.f32 %v1035, %v1059
    %v1075 = vsub.f32 %v1038, %v1061
    %v1076 = vsub.f32 %v1041, %v1063
    %v1077 = vsub.f32 %v1044, %v1065
    %v1078 = vsub.f32 %v1047, %v1067
    %v1079 = vsub.f32 %v1050, %v1069
    %v1080 = vsub.f32 %v1053, %v1071
    %v1081 = vsub.f32 %v1056, %v1073
    %v1082 = vmul.f32 %v1074, 1.442695
    %v1083 = vpow.pop %v1082
    %v1084 = vmul.f32 %v1075, 1.442695
    %v1085 = vpow.pop %v1084
    %v1086 = vmul.f32 %v1076, 1.442695
    %v1087 = vpow.pop %v1086
    %v1088 = vmul.f32 %v1077, 1.442695
    %v1089 = vpow.pop %v1088
    %v1090 = vmul.f32 %v1078, 1.442695
    %v1091 = vpow.pop %v1090
    %v1092 = vmul.f32 %v1079, 1.442695
    %v1093 = vpow.pop %v1092
    %v1094 = vmul.f32 %v1080, 1.442695
    %v1095 = vpow.pop %v1094
    %v1096 = vmul.f32 %v1081, 1.442695
    %v1097 = vpow.pop %v1096
    %1098 = vadd.xlane.f32.xlu0 %v1083
    %v1099 = vpop.xlane.xlu0 %1098
    %1100 = vadd.xlane.f32.xlu0 %v1085
    %v1101 = vpop.xlane.xlu0 %1100
    %1102 = vadd.xlane.f32.xlu0 %v1087
    %v1103 = vpop.xlane.xlu0 %1102
    %1104 = vadd.xlane.f32.xlu0 %v1089
    %v1105 = vpop.xlane.xlu0 %1104
    %1106 = vadd.xlane.f32.xlu0 %v1091
    %v1107 = vpop.xlane.xlu0 %1106
    %1108 = vadd.xlane.f32.xlu0 %v1093
    %v1109 = vpop.xlane.xlu0 %1108
    %1110 = vadd.xlane.f32.xlu0 %v1095
    %v1111 = vpop.xlane.xlu0 %1110
    %1112 = vadd.xlane.f32.xlu0 %v1097
    %v1113 = vpop.xlane.xlu0 %1112
    %v1114 = vlog2.pop %v1099
    %v1115 = vmul.f32 %v1114, 0.6931472
    %v1116 = vlog2.pop %v1101
    %v1117 = vmul.f32 %v1116, 0.6931472
    %v1118 = vlog2.pop %v1103
    %v1119 = vmul.f32 %v1118, 0.6931472
    %v1120 = vlog2.pop %v1105
    %v1121 = vmul.f32 %v1120, 0.6931472
    %v1122 = vlog2.pop %v1107
    %v1123 = vmul.f32 %v1122, 0.6931472
    %v1124 = vlog2.pop %v1109
    %v1125 = vmul.f32 %v1124, 0.6931472
    %v1126 = vlog2.pop %v1111
    %v1127 = vmul.f32 %v1126, 0.6931472
    %v1128 = vlog2.pop %v1113
    %v1129 = vmul.f32 %v1128, 0.6931472
    %v1130 = vadd.f32 %v1059, %v1115
    %v1131 = vadd.f32 %v1061, %v1117
    %v1132 = vadd.f32 %v1063, %v1119
    %v1133 = vadd.f32 %v1065, %v1121
    %v1134 = vadd.f32 %v1067, %v1123
    %v1135 = vadd.f32 %v1069, %v1125
    %v1136 = vadd.f32 %v1071, %v1127
    %v1137 = vadd.f32 %v1073, %v1129
    %v1138 = vsub.f32 %v1035, %v1130
    %v1139 = vsub.f32 %v1038, %v1131
    %v1140 = vsub.f32 %v1041, %v1132
    %v1141 = vsub.f32 %v1044, %v1133
    %v1142 = vsub.f32 %v1047, %v1134
    %v1143 = vsub.f32 %v1050, %v1135
    %v1144 = vsub.f32 %v1053, %v1136
    %v1145 = vsub.f32 %v1056, %v1137
    %1146 = vst [vmem:[#allocation5] sm:$0xff] %v1138
    %1147 = vst [vmem:[#allocation5 + $0x8] sm:$0xff] %v1139
    %1148 = vst [vmem:[#allocation5 + $0x10] sm:$0xff] %v1140
    %1149 = vst [vmem:[#allocation5 + $0x18] sm:$0xff] %v1141
    %1150 = vst [vmem:[#allocation5 + $0x20] sm:$0xff] %v1142
    %1151 = vst [vmem:[#allocation5 + $0x28] sm:$0xff] %v1143
    %1152 = vst [vmem:[#allocation5 + $0x30] sm:$0xff] %v1144
    %1153 = vst [vmem:[#allocation5 + $0x38] sm:$0xff] %v1145
    %v1154 = vld [vmem:[%s1] sm:$0xff]
    %v1155 = vld [vmem:[%s1 + $0x8] sm:$0xff]
    %v1156 = vld [vmem:[%s1 + $0x10] sm:$0xff]
    %v1157 = vld [vmem:[%s1 + $0x18] sm:$0xff]
    %v1158 = vld [vmem:[%s1 + $0x20] sm:$0xff]
    %v1159 = vld [vmem:[%s1 + $0x28] sm:$0xff]
    %v1160 = vld [vmem:[%s1 + $0x30] sm:$0xff]
    %v1161 = vld [vmem:[%s1 + $0x38] sm:$0xff]
    %1162 = vset.pattern.permute.xlu0 0
    %1163 = vperm.xlu0 %1162, %v1154
    %v1164 = vpop.permute.xlu0 %1163
    %1165 = vset.pattern.permute.xlu0 0
    %1166 = vperm.xlu0 %1165, %v1155
    %v1167 = vpop.permute.xlu0 %1166
    %1168 = vset.pattern.permute.xlu0 0
    %1169 = vperm.xlu0 %1168, %v1156
    %v1170 = vpop.permute.xlu0 %1169
    %1171 = vset.pattern.permute.xlu0 0
    %1172 = vperm.xlu0 %1171, %v1157
    %v1173 = vpop.permute.xlu0 %1172
    %1174 = vset.pattern.permute.xlu0 0
    %1175 = vperm.xlu0 %1174, %v1158
    %v1176 = vpop.permute.xlu0 %1175
    %1177 = vset.pattern.permute.xlu0 0
    %1178 = vperm.xlu0 %1177, %v1159
    %v1179 = vpop.permute.xlu0 %1178
    %1180 = vset.pattern.permute.xlu0 0
    %1181 = vperm.xlu0 %1180, %v1160
    %v1182 = vpop.permute.xlu0 %1181
    %1183 = vset.pattern.permute.xlu0 0
    %1184 = vperm.xlu0 %1183, %v1161
    %v1185 = vpop.permute.xlu0 %1184
    %vm1186 = vcmp.eq.s32.totalorder %v52, %v1164
    %vm1187 = vcmp.eq.s32.totalorder %v52, %v1167
    %vm1188 = vcmp.eq.s32.totalorder %v52, %v1170
    %vm1189 = vcmp.eq.s32.totalorder %v52, %v1173
    %vm1190 = vcmp.eq.s32.totalorder %v52, %v1176
    %vm1191 = vcmp.eq.s32.totalorder %v52, %v1179
    %vm1192 = vcmp.eq.s32.totalorder %v52, %v1182
    %vm1193 = vcmp.eq.s32.totalorder %v52, %v1185
    %v1194 = vsel %vm1186, %v1138, 0.0
    %v1195 = vsel %vm1187, %v1139, 0.0
    %v1196 = vsel %vm1188, %v1140, 0.0
    %v1197 = vsel %vm1189, %v1141, 0.0
    %v1198 = vsel %vm1190, %v1142, 0.0
    %v1199 = vsel %vm1191, %v1143, 0.0
    %v1200 = vsel %vm1192, %v1144, 0.0
    %v1201 = vsel %vm1193, %v1145, 0.0
    %1202 = vadd.xlane.f32.xlu0 %v1194
    %v1203 = vpop.xlane.xlu0 %1202
    %1204 = vadd.xlane.f32.xlu0 %v1195
    %v1205 = vpop.xlane.xlu0 %1204
    %1206 = vadd.xlane.f32.xlu0 %v1196
    %v1207 = vpop.xlane.xlu0 %1206
    %1208 = vadd.xlane.f32.xlu0 %v1197
    %v1209 = vpop.xlane.xlu0 %1208
    %1210 = vadd.xlane.f32.xlu0 %v1198
    %v1211 = vpop.xlane.xlu0 %1210
    %1212 = vadd.xlane.f32.xlu0 %v1199
    %v1213 = vpop.xlane.xlu0 %1212
    %1214 = vadd.xlane.f32.xlu0 %v1200
    %v1215 = vpop.xlane.xlu0 %1214
    %1216 = vadd.xlane.f32.xlu0 %v1201
    %v1217 = vpop.xlane.xlu0 %1216
    %v1218 = vsub.f32 0.0, %v1203
    %v1219 = vsub.f32 0.0, %v1205
    %v1220 = vsub.f32 0.0, %v1207
    %v1221 = vsub.f32 0.0, %v1209
    %v1222 = vsub.f32 0.0, %v1211
    %v1223 = vsub.f32 0.0, %v1213
    %v1224 = vsub.f32 0.0, %v1215
    %v1225 = vsub.f32 0.0, %v1217
    %vm1226 = vcmp.eq.s32.totalorder %v1154, 0
    %vm1227 = vcmp.eq.s32.totalorder %v1155, 0
    %vm1228 = vcmp.eq.s32.totalorder %v1156, 0
    %vm1229 = vcmp.eq.s32.totalorder %v1157, 0
    %vm1230 = vcmp.eq.s32.totalorder %v1158, 0
    %vm1231 = vcmp.eq.s32.totalorder %v1159, 0
    %vm1232 = vcmp.eq.s32.totalorder %v1160, 0
    %vm1233 = vcmp.eq.s32.totalorder %v1161, 0
    %v1234 = vsel %vm1226, 0.0, %v1218
    %v1235 = vsel %vm1227, 0.0, %v1219
    %v1236 = vsel %vm1228, 0.0, %v1220
    %v1237 = vsel %vm1229, 0.0, %v1221
    %v1238 = vsel %vm1230, 0.0, %v1222
    %v1239 = vsel %vm1231, 0.0, %v1223
    %v1240 = vsel %vm1232, 0.0, %v1224
    %v1241 = vsel %vm1233, 0.0, %v1225
    %vm1242 = vcmask 7168
    %1243 = vst.msk [vmem:[%s10] sm:$0xff] %vm1242, %v1234
    %1244 = vst.msk [vmem:[%s10 + $0x8] sm:$0xff] %vm1242, %v1235
    %1245 = vst.msk [vmem:[%s10 + $0x10] sm:$0xff] %vm1242, %v1236
    %1246 = vst.msk [vmem:[%s10 + $0x18] sm:$0xff] %vm1242, %v1237
    %1247 = vst.msk [vmem:[%s10 + $0x20] sm:$0xff] %vm1242, %v1238
    %1248 = vst.msk [vmem:[%s10 + $0x28] sm:$0xff] %vm1242, %v1239
    %1249 = vst.msk [vmem:[%s10 + $0x30] sm:$0xff] %vm1242, %v1240
    %1250 = vst.msk [vmem:[%s10 + $0x38] sm:$0xff] %vm1242, %v1241
    // Predicated region
    $region42: #{tpu_custom_call.1} parent=1 // pred_check
      _
    $region43: #{tpu_custom_call.1} parent=1 // pred_check_branch
      %1252 = sbr.rel (0) target = $region45
    $region44: #{tpu_custom_call.1} parent=1 // pred_region
      %1254 = vsyncadd [#allocation4], 0
      %s1255 = sshll.u32 [#allocation5], 4
      %s1256 = int_to_ptr.vmem [resolvable:$true] %s1255
      %s1257 = sshll.u32 %s9, 4
      %s1258 = int_to_ptr.hbm [resolvable:$true] %s1257
      %1263 = dma.vmem_to_hbm [thread:$0]  %s1256, 1024, %s1258, [#allocation4], 128, 128, 8
    $region45: #{tpu_custom_call.1} parent=1 // pred_fallthru
      _
    // Predicated region
    $region46: #{tpu_custom_call.1} parent=1 // pred_check
      _
    $region47: #{tpu_custom_call.1} parent=1 // pred_check_branch
      %1265 = sbr.rel (0) target = $region49
    $region48: #{tpu_custom_call.1} parent=1 // pred_region
      _
    $region49: #{tpu_custom_call.1} parent=1 // pred_fallthru
      _
    // Predicated region
    $region50: #{tpu_custom_call.1} parent=1 // pred_check
      _
    $region51: #{tpu_custom_call.1} parent=1 // pred_check_branch
      %1267 = sbr.rel (0) target = $region53
    $region52: #{tpu_custom_call.1} parent=1 // pred_region
      %1269 = dma.done [#allocation4], 1024
    $region53: #{tpu_custom_call.1} parent=1 // pred_fallthru
      _
    // Predicated region
    $region54: #{tpu_custom_call.1} parent=1 // pred_check
      _
    $region55: #{tpu_custom_call.1} parent=1 // pred_check_branch
      %1271 = sbr.rel (0) target = $region57
    $region56: #{tpu_custom_call.1} parent=1 // pred_region
      _
    $region57: #{tpu_custom_call.1} parent=1 // pred_fallthru
      _
    %1272 = vsyncpa [#allocation3], 1
    %1273 = vsyncpa [#allocation4], 1

</llo_original>
